<compile_context>
chip_gen: v7x
topology: tpu7x:2x2x1
jax: 0.10.0
libtpu: 0.0.40
codegen_flags: <defaults>
</compile_context>

<pallas_src>
import functools

import jax
import jax.numpy as jnp
import numpy as np
from jax.experimental import pallas as pl
from jax.experimental.pallas import tpu as pltpu

EPS = 1e-5


def _vmem():
    return pl.BlockSpec(memory_space=pltpu.MemorySpace.VMEM)


# ---------------------------------------------------------------------------
# Fused kernel: the entire residual block in one invocation.
# ---------------------------------------------------------------------------
def fused_resblock_kernel(
        x_ref, mask_ref,
        w1_ref, b1_ref, g1_ref, bt1_ref,
        w2_ref, b2_ref, g2_ref, bt2_ref,
        w3_ref, b3_ref, g3_ref, bt3_ref,
        ws_ref, gs_ref, bts_ref,
        o_ref,
        *, n_valid, wp):
    # Channels-first, lane-dense layout:
    #   x_ref  : (Cin, Mp)  bf16, spatially zero-padded input, flattened
    #            row-major (n, h, w) and zero-extended so Mp % 128 == 0.
    #   mask   : (1,  Mp)   f32, 1.0 on valid (non-padded) pixels.
    #   w2_ref : (C2, 9*C1) flattened (dh, dw, cin) taps of the 3x3 conv.
    #   biases / BN params : (C, 1), broadcast across lanes.
    mp = x_ref.shape[1]
    inv_n = 1.0 / float(n_valid)

    mask = mask_ref[...]

    def masked_bn(y, g, bt):
        # Training-mode BN (biased variance) over valid pixels, one pass.
        ym = y * mask
        s1 = jnp.sum(ym, axis=1, keepdims=True)
        s2 = jnp.sum(ym * y, axis=1, keepdims=True)
        mean = s1 * inv_n
        var = s2 * inv_n - mean * mean
        return (y - mean) * jax.lax.rsqrt(var + EPS) * g + bt

    xb = x_ref[...]                                  # already bf16

    # ---- conv1 (1x1) + bn1 + relu  (bf16 MXU operands, f32 accumulate) ----
    y1 = jnp.dot(w1_ref[...].astype(jnp.bfloat16), xb,
                 preferred_element_type=jnp.float32) + b1_ref[...]
    # Multiplying by mask zeroes padded pixels -> exactly conv2's zero padding.
    h1 = jnp.maximum(masked_bn(y1, g1_ref[...], bt1_ref[...]), 0.0) * mask

    # ---- conv2 (3x3, pad 1): one K = 9*C1 matmul over lane-rolled taps -----
    # tap(dh, dw)[:, m] = h1[:, m + (dh-1)*Wp + (dw-1)]; roll wrap-around only
    # lands on masked padded / tail pixels, which never feed valid outputs.
    taps = []
    for dh in range(3):
        for dw in range(3):
            s = (dh - 1) * wp + (dw - 1)             # static flat shift
            taps.append(h1 if s == 0 else pltpu.roll(h1, shift=(-s) % mp, axis=1))
    slab = jnp.concatenate(taps, axis=0).astype(jnp.bfloat16)   # (9*C1, Mp)
    y2 = jnp.dot(w2_ref[...].astype(jnp.bfloat16), slab,
                 preferred_element_type=jnp.float32) + b2_ref[...]
    h2 = jnp.maximum(masked_bn(y2, g2_ref[...], bt2_ref[...]), 0.0)

    # ---- projection shortcut: 1x1 conv (no bias) + bn ----------------------
    ysc = jnp.dot(ws_ref[...].astype(jnp.bfloat16), xb,
                  preferred_element_type=jnp.float32)
    sc = masked_bn(ysc, gs_ref[...], bts_ref[...])

    # ---- conv3 (1x1) + bn3 + residual add + relu ---------------------------
    y3 = jnp.dot(w3_ref[...].astype(jnp.bfloat16), h2.astype(jnp.bfloat16),
                 preferred_element_type=jnp.float32) + b3_ref[...]
    h3 = masked_bn(y3, g3_ref[...], bt3_ref[...])
    o_ref[...] = jnp.maximum(h3 + sc, 0.0)           # padded pixels dropped outside


# ---------------------------------------------------------------------------
# Wrapper (layout glue only; all compute is inside the single pallas_call)
# ---------------------------------------------------------------------------
def resblock3_forward(x_nchw, p):
    """ResBlock3.forward with strides=[1,1,1], kernel_size=[1,3,1]."""
    N, Cin, H, W = x_nchw.shape
    Hp, Wp = H + 2, W + 2
    Mp = N * Hp * Wp                      # padded-frame pixel count
    M = N * H * W                         # valid pixel count (BN denominator)
    MP_PAD = -(-Mp // 128) * 128          # lane-aligned flat length
    C1 = p["w2"].shape[2]
    C2 = p["w2"].shape[3]
    C3 = p["w3"].shape[0]

    # Channels-first flattened padded activation, bf16 for half the DMA.
    xp = jnp.pad(x_nchw.astype(jnp.float32),
                 ((0, 0), (0, 0), (1, 1), (1, 1)))            # (N, Cin, Hp, Wp)
    xcf = jnp.transpose(xp, (1, 0, 2, 3)).reshape(Cin, Mp)    # (Cin, Mp)
    xcf = jnp.pad(xcf, ((0, 0), (0, MP_PAD - Mp))).astype(jnp.bfloat16)

    idx = np.arange(MP_PAD)
    hh = (idx // Wp) % Hp
    ww = idx % Wp
    valid = (idx < Mp) & (hh >= 1) & (hh <= H) & (ww >= 1) & (ww <= W)
    mask = jnp.asarray(valid.astype(np.float32).reshape(1, MP_PAD))

    # (3,3,C1,C2) -> (C2, 9*C1) with columns ordered (dh, dw, cin).
    w2flat = jnp.transpose(p["w2"].reshape(9 * C1, C2))

    out2d = pl.pallas_call(
        functools.partial(fused_resblock_kernel, n_valid=M, wp=Wp),
        out_shape=jax.ShapeDtypeStruct((C3, MP_PAD), jnp.float32),
        in_specs=[_vmem()] * 17,
        out_specs=_vmem(),
        compiler_params=pltpu.CompilerParams(
            vmem_limit_bytes=32 * 1024 * 1024),
    )(xcf, mask,
      p["w1"], p["b1"], p["g1"], p["bt1"],
      w2flat, p["b2"], p["g2"], p["bt2"],
      p["w3"], p["b3"], p["g3"], p["bt3"],
      p["ws"], p["gs"], p["bts"])

    out = out2d[:, :Mp].reshape(C3, N, Hp, Wp)[:, :, 1:H + 1, 1:W + 1]
    return jnp.transpose(out, (1, 0, 2, 3))                   # back to NCHW


# ---------------------------------------------------------------------------
# Deterministic parameter init (shapes from the module's __init__)
# ---------------------------------------------------------------------------
def init_params(key, in_channels, out_channels):
    cin0, cin1, cin2 = in_channels
    c0, c1, c2 = out_channels
    ks = jax.random.split(key, 16)

    def nrm(k, shape, scale=0.1):
        return scale * jax.random.normal(k, shape, jnp.float32)

    return dict(
        w1=nrm(ks[0], (c0, cin0)), b1=nrm(ks[1], (c0, 1)),
        g1=1.0 + nrm(ks[2], (c0, 1)), bt1=nrm(ks[3], (c0, 1)),
        w2=nrm(ks[4], (3, 3, cin1, c1)), b2=nrm(ks[5], (c1, 1)),
        g2=1.0 + nrm(ks[6], (c1, 1)), bt2=nrm(ks[7], (c1, 1)),
        w3=nrm(ks[8], (c2, cin2)), b3=nrm(ks[9], (c2, 1)),
        g3=1.0 + nrm(ks[10], (c2, 1)), bt3=nrm(ks[11], (c2, 1)),
        ws=nrm(ks[12], (c2, cin0)),
        gs=1.0 + nrm(ks[13], (c2, 1)), bts=nrm(ks[14], (c2, 1)),
    )


# ---------------------------------------------------------------------------
# Pure-JAX f32 reference (NCHW, mirrors the PyTorch module in training mode)
# ---------------------------------------------------------------------------
def _ref_conv(x, w_oihw, b, pad):
    out = jax.lax.conv_general_dilated(
        x, w_oihw, window_strides=(1, 1),
        padding=((pad, pad), (pad, pad)),
        dimension_numbers=("NCHW", "OIHW", "NCHW"))
    if b is not None:
        out = out + b.reshape(1, -1, 1, 1)
    return out


def _ref_bn(x, gamma, beta):
    mean = jnp.mean(x, axis=(0, 2, 3), keepdims=True)
    var = jnp.mean(jnp.square(x - mean), axis=(0, 2, 3), keepdims=True)
    return ((x - mean) * jax.lax.rsqrt(var + EPS)
            * gamma.reshape(1, -1, 1, 1) + beta.reshape(1, -1, 1, 1))


def resblock3_reference(x, p):
    w1 = p["w1"][:, :, None, None]                           # OIHW
    w2 = jnp.transpose(p["w2"], (3, 2, 0, 1))                # HWIO -> OIHW
    w3 = p["w3"][:, :, None, None]
    ws = p["ws"][:, :, None, None]
    h = jax.nn.relu(_ref_bn(_ref_conv(x, w1, p["b1"].reshape(-1), 0),
                            p["g1"].reshape(-1), p["bt1"].reshape(-1)))
    h = jax.nn.relu(_ref_bn(_ref_conv(h, w2, p["b2"].reshape(-1), 1),
                            p["g2"].reshape(-1), p["bt2"].reshape(-1)))
    h = _ref_bn(_ref_conv(h, w3, p["b3"].reshape(-1), 0),
                p["g3"].reshape(-1), p["bt3"].reshape(-1))
    sc = _ref_bn(_ref_conv(x, ws, None, 0),
                 p["gs"].reshape(-1), p["bts"].reshape(-1))
    return jax.nn.relu(h + sc)


if __name__ == "__main__":
    key = jax.random.PRNGKey(0)
    kx, kp = jax.random.split(key)

    in_channels = [4, 8, 8]
    out_channels = [8, 8, 16]       # strides = [1, 1, 1]

    x = jax.random.normal(kx, (2, 4, 16, 16), jnp.float32)  # NCHW, like PyTorch
    params = init_params(kp, in_channels, out_channels)

    out = resblock3_forward(x, params)
    out = jax.block_until_ready(out)
    assert out.shape == (2, 16, 16, 16), out.shape

    ref = resblock3_reference(x, params)
    # Kernel uses bf16 MXU operands (f32 accumulate / BN), so compare loosely
    # against the all-f32 reference.
    np.testing.assert_allclose(np.asarray(out), np.asarray(ref),
                               rtol=5e-2, atol=5e-2)
    print("KERNEL_OK")
</pallas_src>

<mosaic_0001>
module attributes {stable_mosaic.version = 11 : i64} {
  func.func @fused_resblock_kernel(%arg0: memref<4x768xbf16, #tpu.memory_space<vmem>>, %arg1: memref<1x768xf32, #tpu.memory_space<vmem>>, %arg2: memref<8x4xf32, #tpu.memory_space<vmem>>, %arg3: memref<8x1xf32, #tpu.memory_space<vmem>>, %arg4: memref<8x1xf32, #tpu.memory_space<vmem>>, %arg5: memref<8x1xf32, #tpu.memory_space<vmem>>, %arg6: memref<8x72xf32, #tpu.memory_space<vmem>>, %arg7: memref<8x1xf32, #tpu.memory_space<vmem>>, %arg8: memref<8x1xf32, #tpu.memory_space<vmem>>, %arg9: memref<8x1xf32, #tpu.memory_space<vmem>>, %arg10: memref<16x8xf32, #tpu.memory_space<vmem>>, %arg11: memref<16x1xf32, #tpu.memory_space<vmem>>, %arg12: memref<16x1xf32, #tpu.memory_space<vmem>>, %arg13: memref<16x1xf32, #tpu.memory_space<vmem>>, %arg14: memref<16x4xf32, #tpu.memory_space<vmem>>, %arg15: memref<16x1xf32, #tpu.memory_space<vmem>>, %arg16: memref<16x1xf32, #tpu.memory_space<vmem>>, %arg17: memref<16x768xf32, #tpu.memory_space<vmem>>) attributes {dimension_semantics = [], scalar_prefetch = 0 : i64, scratch_operands = 0 : i64, tpu.core_type = #tpu.core_type<tc>} {
    %c0 = arith.constant 0 : index
    %c0_0 = arith.constant 0 : index
    %0 = vector.load %arg1[%c0, %c0_0] : memref<1x768xf32, #tpu.memory_space<vmem>>, vector<1x768xf32>
    %c0_1 = arith.constant 0 : index
    %c0_2 = arith.constant 0 : index
    %1 = vector.load %arg0[%c0_1, %c0_2] : memref<4x768xbf16, #tpu.memory_space<vmem>>, vector<4x768xbf16>
    %c0_3 = arith.constant 0 : index
    %c0_4 = arith.constant 0 : index
    %2 = vector.load %arg2[%c0_3, %c0_4] : memref<8x4xf32, #tpu.memory_space<vmem>>, vector<8x4xf32>
    %3 = arith.truncf %2 : vector<8x4xf32> to vector<8x4xbf16>
    %cst = arith.constant dense<0.000000e+00> : vector<8x768xf32>
    %4 = tpu.matmul %3, %1, %cst {dimension_numbers = #tpu.dot_dimension_numbers<[1], [0], [0], [1], [0, 0, 1, 1], [], []>} : vector<8x4xbf16>, vector<4x768xbf16>, vector<8x768xf32> -> vector<8x768xf32>
    %c0_5 = arith.constant 0 : index
    %c0_6 = arith.constant 0 : index
    %5 = vector.load %arg3[%c0_5, %c0_6] : memref<8x1xf32, #tpu.memory_space<vmem>>, vector<8x1xf32>
    %6 = vector.broadcast %5 : vector<8x1xf32> to vector<8x768xf32>
    %7 = arith.addf %4, %6 : vector<8x768xf32>
    %c0_7 = arith.constant 0 : index
    %c0_8 = arith.constant 0 : index
    %8 = vector.load %arg4[%c0_7, %c0_8] : memref<8x1xf32, #tpu.memory_space<vmem>>, vector<8x1xf32>
    %c0_9 = arith.constant 0 : index
    %c0_10 = arith.constant 0 : index
    %9 = vector.load %arg5[%c0_9, %c0_10] : memref<8x1xf32, #tpu.memory_space<vmem>>, vector<8x1xf32>
    %10 = vector.broadcast %0 : vector<1x768xf32> to vector<8x768xf32>
    %11 = arith.mulf %7, %10 : vector<8x768xf32>
    %cst_11 = arith.constant dense<0.000000e+00> : vector<8xf32>
    %12 = vector.multi_reduction <add>, %11, %cst_11 [1] : vector<8x768xf32> to vector<8xf32>
    %13 = vector.shape_cast %12 : vector<8xf32> to vector<8x1xf32>
    %14 = arith.mulf %11, %7 : vector<8x768xf32>
    %cst_12 = arith.constant dense<0.000000e+00> : vector<8xf32>
    %15 = vector.multi_reduction <add>, %14, %cst_12 [1] : vector<8x768xf32> to vector<8xf32>
    %16 = vector.shape_cast %15 : vector<8xf32> to vector<8x1xf32>
    %cst_13 = arith.constant 0.001953125 : f32
    %17 = vector.broadcast %cst_13 : f32 to vector<8x1xf32>
    %18 = arith.mulf %13, %17 : vector<8x1xf32>
    %cst_14 = arith.constant 0.001953125 : f32
    %19 = vector.broadcast %cst_14 : f32 to vector<8x1xf32>
    %20 = arith.mulf %16, %19 : vector<8x1xf32>
    %21 = arith.mulf %18, %18 : vector<8x1xf32>
    %22 = arith.subf %20, %21 : vector<8x1xf32>
    %23 = vector.broadcast %18 : vector<8x1xf32> to vector<8x768xf32>
    %24 = arith.subf %7, %23 : vector<8x768xf32>
    %cst_15 = arith.constant 9.99999974E-6 : f32
    %25 = vector.broadcast %cst_15 : f32 to vector<8x1xf32>
    %26 = arith.addf %22, %25 : vector<8x1xf32>
    %27 = math.rsqrt %26 : vector<8x1xf32>
    %28 = vector.broadcast %27 : vector<8x1xf32> to vector<8x768xf32>
    %29 = arith.mulf %24, %28 : vector<8x768xf32>
    %30 = vector.broadcast %8 : vector<8x1xf32> to vector<8x768xf32>
    %31 = arith.mulf %29, %30 : vector<8x768xf32>
    %32 = vector.broadcast %9 : vector<8x1xf32> to vector<8x768xf32>
    %33 = arith.addf %31, %32 : vector<8x768xf32>
    %cst_16 = arith.constant 0.000000e+00 : f32
    %34 = vector.broadcast %cst_16 : f32 to vector<8x768xf32>
    %35 = arith.maximumf %33, %34 : vector<8x768xf32>
    %36 = vector.broadcast %0 : vector<1x768xf32> to vector<8x768xf32>
    %37 = arith.mulf %35, %36 : vector<8x768xf32>
    %c19_i32 = arith.constant 19 : i32
    %38 = tpu.dynamic_rotate %37 by %c19_i32 dim 1 : vector<8x768xf32>, i32 -> vector<8x768xf32>
    %c18_i32 = arith.constant 18 : i32
    %39 = tpu.dynamic_rotate %37 by %c18_i32 dim 1 : vector<8x768xf32>, i32 -> vector<8x768xf32>
    %c17_i32 = arith.constant 17 : i32
    %40 = tpu.dynamic_rotate %37 by %c17_i32 dim 1 : vector<8x768xf32>, i32 -> vector<8x768xf32>
    %c1_i32 = arith.constant 1 : i32
    %41 = tpu.dynamic_rotate %37 by %c1_i32 dim 1 : vector<8x768xf32>, i32 -> vector<8x768xf32>
    %c767_i32 = arith.constant 767 : i32
    %42 = tpu.dynamic_rotate %37 by %c767_i32 dim 1 : vector<8x768xf32>, i32 -> vector<8x768xf32>
    %c751_i32 = arith.constant 751 : i32
    %43 = tpu.dynamic_rotate %37 by %c751_i32 dim 1 : vector<8x768xf32>, i32 -> vector<8x768xf32>
    %c750_i32 = arith.constant 750 : i32
    %44 = tpu.dynamic_rotate %37 by %c750_i32 dim 1 : vector<8x768xf32>, i32 -> vector<8x768xf32>
    %c749_i32 = arith.constant 749 : i32
    %45 = tpu.dynamic_rotate %37 by %c749_i32 dim 1 : vector<8x768xf32>, i32 -> vector<8x768xf32>
    %46 = tpu.concatenate %38, %39, %40, %41, %37, %42, %43, %44, %45 in 0 : vector<8x768xf32>, vector<8x768xf32>, vector<8x768xf32>, vector<8x768xf32>, vector<8x768xf32>, vector<8x768xf32>, vector<8x768xf32>, vector<8x768xf32>, vector<8x768xf32> -> vector<72x768xf32>
    %47 = arith.truncf %46 : vector<72x768xf32> to vector<72x768xbf16>
    %c0_17 = arith.constant 0 : index
    %c0_18 = arith.constant 0 : index
    %48 = vector.load %arg6[%c0_17, %c0_18] : memref<8x72xf32, #tpu.memory_space<vmem>>, vector<8x72xf32>
    %49 = arith.truncf %48 : vector<8x72xf32> to vector<8x72xbf16>
    %cst_19 = arith.constant dense<0.000000e+00> : vector<8x768xf32>
    %50 = tpu.matmul %49, %47, %cst_19 {dimension_numbers = #tpu.dot_dimension_numbers<[1], [0], [0], [1], [0, 0, 1, 1], [], []>} : vector<8x72xbf16>, vector<72x768xbf16>, vector<8x768xf32> -> vector<8x768xf32>
    %c0_20 = arith.constant 0 : index
    %c0_21 = arith.constant 0 : index
    %51 = vector.load %arg7[%c0_20, %c0_21] : memref<8x1xf32, #tpu.memory_space<vmem>>, vector<8x1xf32>
    %52 = vector.broadcast %51 : vector<8x1xf32> to vector<8x768xf32>
    %53 = arith.addf %50, %52 : vector<8x768xf32>
    %c0_22 = arith.constant 0 : index
    %c0_23 = arith.constant 0 : index
    %54 = vector.load %arg8[%c0_22, %c0_23] : memref<8x1xf32, #tpu.memory_space<vmem>>, vector<8x1xf32>
    %c0_24 = arith.constant 0 : index
    %c0_25 = arith.constant 0 : index
    %55 = vector.load %arg9[%c0_24, %c0_25] : memref<8x1xf32, #tpu.memory_space<vmem>>, vector<8x1xf32>
    %56 = vector.broadcast %0 : vector<1x768xf32> to vector<8x768xf32>
    %57 = arith.mulf %53, %56 : vector<8x768xf32>
    %cst_26 = arith.constant dense<0.000000e+00> : vector<8xf32>
    %58 = vector.multi_reduction <add>, %57, %cst_26 [1] : vector<8x768xf32> to vector<8xf32>
    %59 = vector.shape_cast %58 : vector<8xf32> to vector<8x1xf32>
    %60 = arith.mulf %57, %53 : vector<8x768xf32>
    %cst_27 = arith.constant dense<0.000000e+00> : vector<8xf32>
    %61 = vector.multi_reduction <add>, %60, %cst_27 [1] : vector<8x768xf32> to vector<8xf32>
    %62 = vector.shape_cast %61 : vector<8xf32> to vector<8x1xf32>
    %cst_28 = arith.constant 0.001953125 : f32
    %63 = vector.broadcast %cst_28 : f32 to vector<8x1xf32>
    %64 = arith.mulf %59, %63 : vector<8x1xf32>
    %cst_29 = arith.constant 0.001953125 : f32
    %65 = vector.broadcast %cst_29 : f32 to vector<8x1xf32>
    %66 = arith.mulf %62, %65 : vector<8x1xf32>
    %67 = arith.mulf %64, %64 : vector<8x1xf32>
    %68 = arith.subf %66, %67 : vector<8x1xf32>
    %69 = vector.broadcast %64 : vector<8x1xf32> to vector<8x768xf32>
    %70 = arith.subf %53, %69 : vector<8x768xf32>
    %cst_30 = arith.constant 9.99999974E-6 : f32
    %71 = vector.broadcast %cst_30 : f32 to vector<8x1xf32>
    %72 = arith.addf %68, %71 : vector<8x1xf32>
    %73 = math.rsqrt %72 : vector<8x1xf32>
    %74 = vector.broadcast %73 : vector<8x1xf32> to vector<8x768xf32>
    %75 = arith.mulf %70, %74 : vector<8x768xf32>
    %76 = vector.broadcast %54 : vector<8x1xf32> to vector<8x768xf32>
    %77 = arith.mulf %75, %76 : vector<8x768xf32>
    %78 = vector.broadcast %55 : vector<8x1xf32> to vector<8x768xf32>
    %79 = arith.addf %77, %78 : vector<8x768xf32>
    %cst_31 = arith.constant 0.000000e+00 : f32
    %80 = vector.broadcast %cst_31 : f32 to vector<8x768xf32>
    %81 = arith.maximumf %79, %80 : vector<8x768xf32>
    %c0_32 = arith.constant 0 : index
    %c0_33 = arith.constant 0 : index
    %82 = vector.load %arg14[%c0_32, %c0_33] : memref<16x4xf32, #tpu.memory_space<vmem>>, vector<16x4xf32>
    %83 = arith.truncf %82 : vector<16x4xf32> to vector<16x4xbf16>
    %cst_34 = arith.constant dense<0.000000e+00> : vector<16x768xf32>
    %84 = tpu.matmul %83, %1, %cst_34 {dimension_numbers = #tpu.dot_dimension_numbers<[1], [0], [0], [1], [0, 0, 1, 1], [], []>} : vector<16x4xbf16>, vector<4x768xbf16>, vector<16x768xf32> -> vector<16x768xf32>
    %c0_35 = arith.constant 0 : index
    %c0_36 = arith.constant 0 : index
    %85 = vector.load %arg15[%c0_35, %c0_36] : memref<16x1xf32, #tpu.memory_space<vmem>>, vector<16x1xf32>
    %c0_37 = arith.constant 0 : index
    %c0_38 = arith.constant 0 : index
    %86 = vector.load %arg16[%c0_37, %c0_38] : memref<16x1xf32, #tpu.memory_space<vmem>>, vector<16x1xf32>
    %87 = vector.broadcast %0 : vector<1x768xf32> to vector<16x768xf32>
    %88 = arith.mulf %84, %87 : vector<16x768xf32>
    %cst_39 = arith.constant dense<0.000000e+00> : vector<16xf32>
    %89 = vector.multi_reduction <add>, %88, %cst_39 [1] : vector<16x768xf32> to vector<16xf32>
    %90 = vector.shape_cast %89 : vector<16xf32> to vector<16x1xf32>
    %91 = arith.mulf %88, %84 : vector<16x768xf32>
    %cst_40 = arith.constant dense<0.000000e+00> : vector<16xf32>
    %92 = vector.multi_reduction <add>, %91, %cst_40 [1] : vector<16x768xf32> to vector<16xf32>
    %93 = vector.shape_cast %92 : vector<16xf32> to vector<16x1xf32>
    %cst_41 = arith.constant 0.001953125 : f32
    %94 = vector.broadcast %cst_41 : f32 to vector<16x1xf32>
    %95 = arith.mulf %90, %94 : vector<16x1xf32>
    %cst_42 = arith.constant 0.001953125 : f32
    %96 = vector.broadcast %cst_42 : f32 to vector<16x1xf32>
    %97 = arith.mulf %93, %96 : vector<16x1xf32>
    %98 = arith.mulf %95, %95 : vector<16x1xf32>
    %99 = arith.subf %97, %98 : vector<16x1xf32>
    %100 = vector.broadcast %95 : vector<16x1xf32> to vector<16x768xf32>
    %101 = arith.subf %84, %100 : vector<16x768xf32>
    %cst_43 = arith.constant 9.99999974E-6 : f32
    %102 = vector.broadcast %cst_43 : f32 to vector<16x1xf32>
    %103 = arith.addf %99, %102 : vector<16x1xf32>
    %104 = math.rsqrt %103 : vector<16x1xf32>
    %105 = vector.broadcast %104 : vector<16x1xf32> to vector<16x768xf32>
    %106 = arith.mulf %101, %105 : vector<16x768xf32>
    %107 = vector.broadcast %85 : vector<16x1xf32> to vector<16x768xf32>
    %108 = arith.mulf %106, %107 : vector<16x768xf32>
    %109 = vector.broadcast %86 : vector<16x1xf32> to vector<16x768xf32>
    %110 = arith.addf %108, %109 : vector<16x768xf32>
    %c0_44 = arith.constant 0 : index
    %c0_45 = arith.constant 0 : index
    %111 = vector.load %arg10[%c0_44, %c0_45] : memref<16x8xf32, #tpu.memory_space<vmem>>, vector<16x8xf32>
    %112 = arith.truncf %111 : vector<16x8xf32> to vector<16x8xbf16>
    %113 = arith.truncf %81 : vector<8x768xf32> to vector<8x768xbf16>
    %cst_46 = arith.constant dense<0.000000e+00> : vector<16x768xf32>
    %114 = tpu.matmul %112, %113, %cst_46 {dimension_numbers = #tpu.dot_dimension_numbers<[1], [0], [0], [1], [0, 0, 1, 1], [], []>} : vector<16x8xbf16>, vector<8x768xbf16>, vector<16x768xf32> -> vector<16x768xf32>
    %c0_47 = arith.constant 0 : index
    %c0_48 = arith.constant 0 : index
    %115 = vector.load %arg11[%c0_47, %c0_48] : memref<16x1xf32, #tpu.memory_space<vmem>>, vector<16x1xf32>
    %116 = vector.broadcast %115 : vector<16x1xf32> to vector<16x768xf32>
    %117 = arith.addf %114, %116 : vector<16x768xf32>
    %c0_49 = arith.constant 0 : index
    %c0_50 = arith.constant 0 : index
    %118 = vector.load %arg12[%c0_49, %c0_50] : memref<16x1xf32, #tpu.memory_space<vmem>>, vector<16x1xf32>
    %c0_51 = arith.constant 0 : index
    %c0_52 = arith.constant 0 : index
    %119 = vector.load %arg13[%c0_51, %c0_52] : memref<16x1xf32, #tpu.memory_space<vmem>>, vector<16x1xf32>
    %120 = vector.broadcast %0 : vector<1x768xf32> to vector<16x768xf32>
    %121 = arith.mulf %117, %120 : vector<16x768xf32>
    %cst_53 = arith.constant dense<0.000000e+00> : vector<16xf32>
    %122 = vector.multi_reduction <add>, %121, %cst_53 [1] : vector<16x768xf32> to vector<16xf32>
    %123 = vector.shape_cast %122 : vector<16xf32> to vector<16x1xf32>
    %124 = arith.mulf %121, %117 : vector<16x768xf32>
    %cst_54 = arith.constant dense<0.000000e+00> : vector<16xf32>
    %125 = vector.multi_reduction <add>, %124, %cst_54 [1] : vector<16x768xf32> to vector<16xf32>
    %126 = vector.shape_cast %125 : vector<16xf32> to vector<16x1xf32>
    %cst_55 = arith.constant 0.001953125 : f32
    %127 = vector.broadcast %cst_55 : f32 to vector<16x1xf32>
    %128 = arith.mulf %123, %127 : vector<16x1xf32>
    %cst_56 = arith.constant 0.001953125 : f32
    %129 = vector.broadcast %cst_56 : f32 to vector<16x1xf32>
    %130 = arith.mulf %126, %129 : vector<16x1xf32>
    %131 = arith.mulf %128, %128 : vector<16x1xf32>
    %132 = arith.subf %130, %131 : vector<16x1xf32>
    %133 = vector.broadcast %128 : vector<16x1xf32> to vector<16x768xf32>
    %134 = arith.subf %117, %133 : vector<16x768xf32>
    %cst_57 = arith.constant 9.99999974E-6 : f32
    %135 = vector.broadcast %cst_57 : f32 to vector<16x1xf32>
    %136 = arith.addf %132, %135 : vector<16x1xf32>
    %137 = math.rsqrt %136 : vector<16x1xf32>
    %138 = vector.broadcast %137 : vector<16x1xf32> to vector<16x768xf32>
    %139 = arith.mulf %134, %138 : vector<16x768xf32>
    %140 = vector.broadcast %118 : vector<16x1xf32> to vector<16x768xf32>
    %141 = arith.mulf %139, %140 : vector<16x768xf32>
    %142 = vector.broadcast %119 : vector<16x1xf32> to vector<16x768xf32>
    %143 = arith.addf %141, %142 : vector<16x768xf32>
    %144 = arith.addf %143, %110 : vector<16x768xf32>
    %cst_58 = arith.constant 0.000000e+00 : f32
    %145 = vector.broadcast %cst_58 : f32 to vector<16x768xf32>
    %146 = arith.maximumf %144, %145 : vector<16x768xf32>
    %c0_59 = arith.constant 0 : index
    %c0_60 = arith.constant 0 : index
    %147 = vector.load %arg17[%c0_59, %c0_60] : memref<16x768xf32, #tpu.memory_space<vmem>>, vector<16x768xf32>
    tpu.vector_store %arg17[%c0_59, %c0_60], %146 {strides = array<i32>} : memref<16x768xf32, #tpu.memory_space<vmem>>, vector<16x768xf32>,
    return
  }
}

</mosaic_0001>

<llo_original>
// kernel: tpu_custom_call.1
$region0: #{tpu_custom_call.1}
  #allocation0 [shape = 'u32[]', space=smem, size = 0x4, offset = 0x4, fixed_abs, tag = 'smem constant byte address 0x4 - core index']
  #allocation1 [shape = 'u32[144,128]{1,0:T(1,128)}', space=vmem, size = 0x12000, scoped, tag = 'internal scratch']
  %s0 = inlined_call_operand.vmem [shape: bf16[4,768], index: 0, kind: input, shape index: {}]
  %s1 = inlined_call_operand.vmem [shape: f32[1,768], index: 1, kind: input, shape index: {}]
  %s2 = inlined_call_operand.vmem [shape: f32[8,4], index: 2, kind: input, shape index: {}]
  %s3 = inlined_call_operand.vmem [shape: f32[8,1], index: 3, kind: input, shape index: {}]
  %s4 = inlined_call_operand.vmem [shape: f32[8,1], index: 4, kind: input, shape index: {}]
  %s5 = inlined_call_operand.vmem [shape: f32[8,1], index: 5, kind: input, shape index: {}]
  %s6 = inlined_call_operand.vmem [shape: f32[8,72], index: 6, kind: input, shape index: {}]
  %s7 = inlined_call_operand.vmem [shape: f32[8,1], index: 7, kind: input, shape index: {}]
  %s8 = inlined_call_operand.vmem [shape: f32[8,1], index: 8, kind: input, shape index: {}]
  %s9 = inlined_call_operand.vmem [shape: f32[8,1], index: 9, kind: input, shape index: {}]
  %s10 = inlined_call_operand.vmem [shape: f32[16,8], index: 10, kind: input, shape index: {}]
  %s11 = inlined_call_operand.vmem [shape: f32[16,1], index: 11, kind: input, shape index: {}]
  %s12 = inlined_call_operand.vmem [shape: f32[16,1], index: 12, kind: input, shape index: {}]
  %s13 = inlined_call_operand.vmem [shape: f32[16,1], index: 13, kind: input, shape index: {}]
  %s14 = inlined_call_operand.vmem [shape: f32[16,4], index: 14, kind: input, shape index: {}]
  %s15 = inlined_call_operand.vmem [shape: f32[16,1], index: 15, kind: input, shape index: {}]
  %s16 = inlined_call_operand.vmem [shape: f32[16,1], index: 16, kind: input, shape index: {}]
  %s17 = inlined_call_operand.hbm [shape: f32[16,768], index: 17, kind: output, shape index: {}]
  %s18 = sld [smem:[#allocation0]]
  $region78: #{tpu_custom_call.1} parent=0
    _
  %s20 = ssub.s32 1, %s18
  %s21 = scalar_select 0, %s20, %s18
  $region1: #{tpu_custom_call.1} parent=0
    #allocation2 [shape = 'u8[49152]{0}', space=vmem, size = 0xc000, scoped, tag = 'output window, operand 0, single buffered']
    #allocation3 [shape = 's32[1]{0}', space=sflag, size = 0x4, scoped, tag = 'scoped memory for tpu_custom_call.1']
    %22 = vsyncpa [#allocation3], 0
    // Predicated region
    $region2: #{tpu_custom_call.1} parent=1 // pred_check
      _
    $region3: #{tpu_custom_call.1} parent=1 // pred_check_branch
      %24 = sbr.rel (0) target = $region5
    $region4: #{tpu_custom_call.1} parent=1 // pred_region
      _
    $region5: #{tpu_custom_call.1} parent=1 // pred_fallthru
      _
    // Predicated region
    $region6: #{tpu_custom_call.1} parent=1 // pred_check
      _
    $region7: #{tpu_custom_call.1} parent=1 // pred_check_branch
      %26 = sbr.rel (0) target = $region9
    $region8: #{tpu_custom_call.1} parent=1 // pred_region
      _
    $region9: #{tpu_custom_call.1} parent=1 // pred_fallthru
      _
    // Predicated region
    $region10: #{tpu_custom_call.1} parent=1 // pred_check
      _
    $region11: #{tpu_custom_call.1} parent=1 // pred_check_branch
      %28 = sbr.rel (0) target = $region13
    $region12: #{tpu_custom_call.1} parent=1 // pred_region
      _
    $region13: #{tpu_custom_call.1} parent=1 // pred_fallthru
      _
    // Predicated region
    $region14: #{tpu_custom_call.1} parent=1 // pred_check
      _
    $region15: #{tpu_custom_call.1} parent=1 // pred_check_branch
      %30 = sbr.rel (0) target = $region17
    $region16: #{tpu_custom_call.1} parent=1 // pred_region
      _
    $region17: #{tpu_custom_call.1} parent=1 // pred_fallthru
      _
    // Predicated region
    $region18: #{tpu_custom_call.1} parent=1 // pred_check
      _
    $region19: #{tpu_custom_call.1} parent=1 // pred_check_branch
      %32 = sbr.rel (0) target = $region21
    $region20: #{tpu_custom_call.1} parent=1 // pred_region
      _
    $region21: #{tpu_custom_call.1} parent=1 // pred_fallthru
      _
    // Predicated region
    $region22: #{tpu_custom_call.1} parent=1 // pred_check
      _
    $region23: #{tpu_custom_call.1} parent=1 // pred_check_branch
      %34 = sbr.rel (0) target = $region25
    $region24: #{tpu_custom_call.1} parent=1 // pred_region
      _
    $region25: #{tpu_custom_call.1} parent=1 // pred_fallthru
      _
    // Predicated region
    $region26: #{tpu_custom_call.1} parent=1 // pred_check
      _
    $region27: #{tpu_custom_call.1} parent=1 // pred_check_branch
      %36 = sbr.rel (0) target = $region29
    $region28: #{tpu_custom_call.1} parent=1 // pred_region
      _
    $region29: #{tpu_custom_call.1} parent=1 // pred_fallthru
      _
    // Predicated region
    $region30: #{tpu_custom_call.1} parent=1 // pred_check
      _
    $region31: #{tpu_custom_call.1} parent=1 // pred_check_branch
      %38 = sbr.rel (0) target = $region33
    $region32: #{tpu_custom_call.1} parent=1 // pred_region
      _
    $region33: #{tpu_custom_call.1} parent=1 // pred_fallthru
      _
    // Predicated region
    $region34: #{tpu_custom_call.1} parent=1 // pred_check
      _
    $region35: #{tpu_custom_call.1} parent=1 // pred_check_branch
      %40 = sbr.rel (0) target = $region37
    $region36: #{tpu_custom_call.1} parent=1 // pred_region
      _
    $region37: #{tpu_custom_call.1} parent=1 // pred_fallthru
      _
    // Predicated region
    $region38: #{tpu_custom_call.1} parent=1 // pred_check
      _
    $region39: #{tpu_custom_call.1} parent=1 // pred_check_branch
      %42 = sbr.rel (0) target = $region41
    $region40: #{tpu_custom_call.1} parent=1 // pred_region
      _
    $region41: #{tpu_custom_call.1} parent=1 // pred_fallthru
      _
    // Predicated region
    $region42: #{tpu_custom_call.1} parent=1 // pred_check
      _
    $region43: #{tpu_custom_call.1} parent=1 // pred_check_branch
      %44 = sbr.rel (0) target = $region45
    $region44: #{tpu_custom_call.1} parent=1 // pred_region
      _
    $region45: #{tpu_custom_call.1} parent=1 // pred_fallthru
      _
    // Predicated region
    $region46: #{tpu_custom_call.1} parent=1 // pred_check
      _
    $region47: #{tpu_custom_call.1} parent=1 // pred_check_branch
      %46 = sbr.rel (0) target = $region49
    $region48: #{tpu_custom_call.1} parent=1 // pred_region
      _
    $region49: #{tpu_custom_call.1} parent=1 // pred_fallthru
      _
    // Predicated region
    $region50: #{tpu_custom_call.1} parent=1 // pred_check
      _
    $region51: #{tpu_custom_call.1} parent=1 // pred_check_branch
      %48 = sbr.rel (0) target = $region53
    $region52: #{tpu_custom_call.1} parent=1 // pred_region
      _
    $region53: #{tpu_custom_call.1} parent=1 // pred_fallthru
      _
    // Predicated region
    $region54: #{tpu_custom_call.1} parent=1 // pred_check
      _
    $region55: #{tpu_custom_call.1} parent=1 // pred_check_branch
      %50 = sbr.rel (0) target = $region57
    $region56: #{tpu_custom_call.1} parent=1 // pred_region
      _
    $region57: #{tpu_custom_call.1} parent=1 // pred_fallthru
      _
    // Predicated region
    $region58: #{tpu_custom_call.1} parent=1 // pred_check
      _
    $region59: #{tpu_custom_call.1} parent=1 // pred_check_branch
      %52 = sbr.rel (0) target = $region61
    $region60: #{tpu_custom_call.1} parent=1 // pred_region
      _
    $region61: #{tpu_custom_call.1} parent=1 // pred_fallthru
      _
    // Predicated region
    $region62: #{tpu_custom_call.1} parent=1 // pred_check
      _
    $region63: #{tpu_custom_call.1} parent=1 // pred_check_branch
      %54 = sbr.rel (0) target = $region65
    $region64: #{tpu_custom_call.1} parent=1 // pred_region
      _
    $region65: #{tpu_custom_call.1} parent=1 // pred_fallthru
      _
    // Predicated region
    $region66: #{tpu_custom_call.1} parent=1 // pred_check
      _
    $region67: #{tpu_custom_call.1} parent=1 // pred_check_branch
      %56 = sbr.rel (0) target = $region69
    $region68: #{tpu_custom_call.1} parent=1 // pred_region
      _
    $region69: #{tpu_custom_call.1} parent=1 // pred_fallthru
      _
    %v58 = vld [vmem:[%s1] sm:$0x3f]
    %v59 = vld [vmem:[%s0] sm:$0xff]
    %v60 = vld [vmem:[%s0 + $0x8] sm:$0xf]
    %v61 = vld [vmem:[%s2] sm:$0xff]
    %v62 = vpack.c.bf16 %v61, %v61
    %v63 = vld [vmem:[%s3] sm:$0xff]
    %65 = vset.pattern.permute.xlu0 0
    %66 = vperm.xlu0 %65, %v63
    %v67 = vpop.permute.xlu0 %66
    %v71 = vcombine.high %v59, %v59
    %v73 = vunpack.c.l.s4 1983009808
    %v74 = vunpack.c.0.s8 %v73
    %v75 = vlaneseq
    %v76 = vshrl.u32 %v75, 7
    %v77 = vsub.s32 %v74, %v76
    %v78 = vrot.slane %v59, %v77
    %v80 = vunpack.c.l.s4 1983009808
    %v81 = vunpack.c.0.s8 %v80
    %v82 = vlaneseq
    %v83 = vshrl.u32 %v82, 7
    %v84 = vsub.s32 %v81, %v83
    %v85 = vrot.slane %v71, %v84
    %v86 = vcombine.high %v78, %v78
    %v87 = vcombine.high %v85, %v85
    %v89 = vunpack.c.l.s4 1983009808
    %v90 = vunpack.c.0.s8 %v89
    %v91 = vlaneseq
    %v92 = vshrl.u32 %v91, 7
    %v93 = vsub.s32 %v90, %v92
    %v94 = vrot.slane %v60, %v93
    %v95 = vcombine.high %v94, %v94
    %vm96 = vcmask 31744
    %v98 = vsel %vm96, %v62, 0
    %vm100 = vcmask 1041408
    %v102 = vsel %vm100, %v78, 0
    %v105 = vsel %vm100, %v86, 0
    %v108 = vsel %vm100, %v85, 0
    %v111 = vsel %vm100, %v87, 0
    %v114 = vsel %vm100, %v94, 0
    %v117 = vsel %vm100, %v95, 0
    %119 = vmatprep.subr.bf16.mxu0 %v105
    %120 = vmatpush1.bf16.msra.mxu0 %v102
    %121 = vmatprep.subr.bf16.mxu0 0
    %122 = vmatpush1.bf16.msra.mxu0 0
    %123 = vmatprep.subr.bf16.mxu0 0
    %124 = vmatpush1.bf16.msra.mxu0 0
    %125 = vmatprep.subr.bf16.mxu0 0
    %126 = vmatpush1.bf16.msra.mxu0 0
    %127 = vmatprep.subr.bf16.mxu0 0
    %128 = vmatpush1.bf16.msra.mxu0 0
    %129 = vmatprep.subr.bf16.mxu0 0
    %130 = vmatpush1.bf16.msra.mxu0 0
    %131 = vmatprep.subr.bf16.mxu0 0
    %132 = vmatpush1.bf16.msra.mxu0 0
    %133 = vmatprep.subr.bf16.mxu0 0
    %134 = vmatpush1.bf16.msra.mxu0 0
    %135 = vmatprep.subr.bf16.mxu0 0
    %136 = vmatpush1.bf16.msra.mxu0 0
    %137 = vmatprep.subr.bf16.mxu0 0
    %138 = vmatpush1.bf16.msra.mxu0 0
    %139 = vmatprep.subr.bf16.mxu0 0
    %140 = vmatpush1.bf16.msra.mxu0 0
    %141 = vmatprep.subr.bf16.mxu0 0
    %142 = vmatpush1.bf16.msra.mxu0 0
    %143 = vmatprep.subr.bf16.mxu0 0
    %144 = vmatpush1.bf16.msra.mxu0 0
    %145 = vmatprep.subr.bf16.mxu0 0
    %146 = vmatpush1.bf16.msra.mxu0 0
    %147 = vmatprep.subr.bf16.mxu0 0
    %148 = vmatpush1.bf16.msra.mxu0 0
    %149 = vmatprep.subr.bf16.mxu0 0
    %150 = vmatpush1.bf16.msra.mxu0 0
    %151 = vmatprep.mubr.bf16.mxu0 0
    %152 = vmatmul.mubr.bf16.gmra.mrb[0].mxu0 %v98
    %v153 = vpop.f32.mrb[0].mxu0
    %v154 = vadd.f32 %v67, %v153
    %v155 = vpop.f32.mrb[0].mxu0
    %v156 = vadd.f32 %v67, %v155
    %v157 = vpop.f32.mrb[0].mxu0
    %v158 = vpop.f32.mrb[0].mxu0
    %159 = vdwg.mxu0
    %160 = vmatprep.subr.bf16.mxu0 %v111
    %161 = vmatpush1.bf16.msra.mxu0 %v108
    %162 = vmatprep.subr.bf16.mxu0 0
    %163 = vmatpush1.bf16.msra.mxu0 0
    %164 = vmatprep.subr.bf16.mxu0 0
    %165 = vmatpush1.bf16.msra.mxu0 0
    %166 = vmatprep.subr.bf16.mxu0 0
    %167 = vmatpush1.bf16.msra.mxu0 0
    %168 = vmatprep.subr.bf16.mxu0 0
    %169 = vmatpush1.bf16.msra.mxu0 0
    %170 = vmatprep.subr.bf16.mxu0 0
    %171 = vmatpush1.bf16.msra.mxu0 0
    %172 = vmatprep.subr.bf16.mxu0 0
    %173 = vmatpush1.bf16.msra.mxu0 0
    %174 = vmatprep.subr.bf16.mxu0 0
    %175 = vmatpush1.bf16.msra.mxu0 0
    %176 = vmatprep.subr.bf16.mxu0 0
    %177 = vmatpush1.bf16.msra.mxu0 0
    %178 = vmatprep.subr.bf16.mxu0 0
    %179 = vmatpush1.bf16.msra.mxu0 0
    %180 = vmatprep.subr.bf16.mxu0 0
    %181 = vmatpush1.bf16.msra.mxu0 0
    %182 = vmatprep.subr.bf16.mxu0 0
    %183 = vmatpush1.bf16.msra.mxu0 0
    %184 = vmatprep.subr.bf16.mxu0 0
    %185 = vmatpush1.bf16.msra.mxu0 0
    %186 = vmatprep.subr.bf16.mxu0 0
    %187 = vmatpush1.bf16.msra.mxu0 0
    %188 = vmatprep.subr.bf16.mxu0 0
    %189 = vmatpush1.bf16.msra.mxu0 0
    %190 = vmatprep.subr.bf16.mxu0 0
    %191 = vmatpush1.bf16.msra.mxu0 0
    %192 = vmatprep.mubr.bf16.mxu0 0
    %193 = vmatmul.mubr.bf16.gmra.mrb[0].mxu0 %v98
    %v194 = vpop.f32.mrb[0].mxu0
    %v195 = vadd.f32 %v67, %v194
    %v196 = vpop.f32.mrb[0].mxu0
    %v197 = vadd.f32 %v67, %v196
    %v198 = vpop.f32.mrb[0].mxu0
    %v199 = vpop.f32.mrb[0].mxu0
    %200 = vdwg.mxu0
    %201 = vmatprep.subr.bf16.mxu0 %v117
    %202 = vmatpush1.bf16.msra.mxu0 %v114
    %203 = vmatprep.subr.bf16.mxu0 0
    %204 = vmatpush1.bf16.msra.mxu0 0
    %205 = vmatprep.subr.bf16.mxu0 0
    %206 = vmatpush1.bf16.msra.mxu0 0
    %207 = vmatprep.subr.bf16.mxu0 0
    %208 = vmatpush1.bf16.msra.mxu0 0
    %209 = vmatprep.subr.bf16.mxu0 0
    %210 = vmatpush1.bf16.msra.mxu0 0
    %211 = vmatprep.subr.bf16.mxu0 0
    %212 = vmatpush1.bf16.msra.mxu0 0
    %213 = vmatprep.subr.bf16.mxu0 0
    %214 = vmatpush1.bf16.msra.mxu0 0
    %215 = vmatprep.subr.bf16.mxu0 0
    %216 = vmatpush1.bf16.msra.mxu0 0
    %217 = vmatprep.subr.bf16.mxu0 0
    %218 = vmatpush1.bf16.msra.mxu0 0
    %219 = vmatprep.subr.bf16.mxu0 0
    %220 = vmatpush1.bf16.msra.mxu0 0
    %221 = vmatprep.subr.bf16.mxu0 0
    %222 = vmatpush1.bf16.msra.mxu0 0
    %223 = vmatprep.subr.bf16.mxu0 0
    %224 = vmatpush1.bf16.msra.mxu0 0
    %225 = vmatprep.subr.bf16.mxu0 0
    %226 = vmatpush1.bf16.msra.mxu0 0
    %227 = vmatprep.subr.bf16.mxu0 0
    %228 = vmatpush1.bf16.msra.mxu0 0
    %229 = vmatprep.subr.bf16.mxu0 0
    %230 = vmatpush1.bf16.msra.mxu0 0
    %231 = vmatprep.subr.bf16.mxu0 0
    %232 = vmatpush1.bf16.msra.mxu0 0
    %233 = vmatprep.mubr.bf16.mxu0 0
    %234 = vmatmul.mubr.bf16.gmra.mrb[0].mxu0 %v98
    %v235 = vpop.f32.mrb[0].mxu0
    %v236 = vadd.f32 %v67, %v235
    %v237 = vpop.f32.mrb[0].mxu0
    %v238 = vadd.f32 %v67, %v237
    %v239 = vpop.f32.mrb[0].mxu0
    %v240 = vpop.f32.mrb[0].mxu0
    %241 = vdwg.mxu0
    %v242 = vld [vmem:[%s4] sm:$0xff]
    %v243 = vld [vmem:[%s5] sm:$0xff]
    %v245 = vlaneseq
    %v246 = vshrl.u32 %v245, 7
    %v247 = vsub.s32 0, %v246
    %v248 = vrot.slane %v58, %v247
    %v249 = vlaneseq
    %v250 = vshrl.u32 %v249, 7
    %v251 = vsub.s32 1, %v250
    %v252 = vrot.slane %v58, %v251
    %v253 = vlaneseq
    %v254 = vshrl.u32 %v253, 7
    %v255 = vsub.s32 2, %v254
    %v256 = vrot.slane %v58, %v255
    %v257 = vlaneseq
    %v258 = vshrl.u32 %v257, 7
    %v259 = vsub.s32 3, %v258
    %v260 = vrot.slane %v58, %v259
    %v261 = vlaneseq
    %v262 = vshrl.u32 %v261, 7
    %v263 = vsub.s32 4, %v262
    %v264 = vrot.slane %v58, %v263
    %v265 = vlaneseq
    %v266 = vshrl.u32 %v265, 7
    %v267 = vsub.s32 5, %v266
    %v268 = vrot.slane %v58, %v267
    %v275 = vmul.f32 %v154, %v248
    %v276 = vmul.f32 %v156, %v252
    %v277 = vmul.f32 %v195, %v256
    %v278 = vmul.f32 %v197, %v260
    %v279 = vmul.f32 %v236, %v264
    %v280 = vmul.f32 %v238, %v268
    %v281 = vadd.f32 %v275, %v276
    %v282 = vadd.f32 %v281, %v277
    %v283 = vadd.f32 %v282, %v278
    %v284 = vadd.f32 %v283, %v279
    %v285 = vadd.f32 %v284, %v280
    %286 = vadd.xlane.f32.xlu0 %v285
    %v287 = vpop.xlane.xlu0 %286
    %v288 = vmul.f32 %v275, %v154
    %v289 = vmul.f32 %v276, %v156
    %v290 = vmul.f32 %v277, %v195
    %v291 = vmul.f32 %v278, %v197
    %v292 = vmul.f32 %v279, %v236
    %v293 = vmul.f32 %v280, %v238
    %v294 = vadd.f32 %v288, %v289
    %v295 = vadd.f32 %v294, %v290
    %v296 = vadd.f32 %v295, %v291
    %v297 = vadd.f32 %v296, %v292
    %v298 = vadd.f32 %v297, %v293
    %299 = vadd.xlane.f32.xlu0 %v298
    %v300 = vpop.xlane.xlu0 %299
    %v301 = vmul.f32 %v287, 0.001953125
    %v302 = vmul.f32 %v300, 0.001953125
    %v303 = vmul.f32 %v301, %v301
    %v304 = vsub.f32 %v302, %v303
    %v305 = vsub.f32 %v154, %v301
    %v306 = vsub.f32 %v156, %v301
    %v307 = vsub.f32 %v195, %v301
    %v308 = vsub.f32 %v197, %v301
    %v309 = vsub.f32 %v236, %v301
    %v310 = vsub.f32 %v238, %v301
    %v311 = vadd.f32 %v304, 1e-05
    %v312 = vrsqrt.pop %v311
    %v313 = vmul.f32 %v305, %v312
    %v314 = vmul.f32 %v306, %v312
    %v315 = vmul.f32 %v307, %v312
    %v316 = vmul.f32 %v308, %v312
    %v317 = vmul.f32 %v309, %v312
    %v318 = vmul.f32 %v310, %v312
    %320 = vset.pattern.permute.xlu0 0
    %321 = vperm.xlu0 %320, %v242
    %v322 = vpop.permute.xlu0 %321
    %v324 = vmul.f32 %v313, %v322
    %v325 = vmul.f32 %v314, %v322
    %v326 = vmul.f32 %v315, %v322
    %v327 = vmul.f32 %v316, %v322
    %v328 = vmul.f32 %v317, %v322
    %v329 = vmul.f32 %v318, %v322
    %331 = vset.pattern.permute.xlu0 0
    %332 = vperm.xlu0 %331, %v243
    %v333 = vpop.permute.xlu0 %332
    %v335 = vadd.f32 %v324, %v333
    %v336 = vadd.f32 %v325, %v333
    %v337 = vadd.f32 %v326, %v333
    %v338 = vadd.f32 %v327, %v333
    %v339 = vadd.f32 %v328, %v333
    %v340 = vadd.f32 %v329, %v333
    %v341 = vmax.f32 %v335, 0.0
    %v342 = vmax.f32 %v336, 0.0
    %v343 = vmax.f32 %v337, 0.0
    %v344 = vmax.f32 %v338, 0.0
    %v345 = vmax.f32 %v339, 0.0
    %v346 = vmax.f32 %v340, 0.0
    %v347 = vmul.f32 %v341, %v248
    %v348 = vmul.f32 %v342, %v252
    %v349 = vmul.f32 %v343, %v256
    %v350 = vmul.f32 %v344, %v260
    %v351 = vmul.f32 %v345, %v264
    %v352 = vmul.f32 %v346, %v268
    %353 = vrot.lane.b32.xlu0 %v347, 19
    %v354 = vpop.permute.xlu0 %353
    %355 = vrot.lane.b32.xlu0 %v348, 19
    %v356 = vpop.permute.xlu0 %355
    %357 = vrot.lane.b32.xlu0 %v349, 19
    %v358 = vpop.permute.xlu0 %357
    %359 = vrot.lane.b32.xlu0 %v350, 19
    %v360 = vpop.permute.xlu0 %359
    %361 = vrot.lane.b32.xlu0 %v351, 19
    %v362 = vpop.permute.xlu0 %361
    %363 = vrot.lane.b32.xlu0 %v352, 19
    %v364 = vpop.permute.xlu0 %363
    %v365 = vlaneseq
    %v366 = vand.u32 %v365, 127
    %vm367 = vcmp.lt.s32.totalorder %v366, 19
    %v368 = vsel %vm367, %v362, %v364
    %v369 = vsel %vm367, %v360, %v362
    %v370 = vsel %vm367, %v358, %v360
    %v371 = vsel %vm367, %v356, %v358
    %v372 = vsel %vm367, %v354, %v356
    %v373 = vsel %vm367, %v364, %v354
    %374 = vrot.lane.b32.xlu0 %v347, 18
    %v375 = vpop.permute.xlu0 %374
    %376 = vrot.lane.b32.xlu0 %v348, 18
    %v377 = vpop.permute.xlu0 %376
    %378 = vrot.lane.b32.xlu0 %v349, 18
    %v379 = vpop.permute.xlu0 %378
    %380 = vrot.lane.b32.xlu0 %v350, 18
    %v381 = vpop.permute.xlu0 %380
    %382 = vrot.lane.b32.xlu0 %v351, 18
    %v383 = vpop.permute.xlu0 %382
    %384 = vrot.lane.b32.xlu0 %v352, 18
    %v385 = vpop.permute.xlu0 %384
    %vm386 = vcmp.lt.s32.totalorder %v366, 18
    %v387 = vsel %vm386, %v383, %v385
    %v388 = vsel %vm386, %v381, %v383
    %v389 = vsel %vm386, %v379, %v381
    %v390 = vsel %vm386, %v377, %v379
    %v391 = vsel %vm386, %v375, %v377
    %v392 = vsel %vm386, %v385, %v375
    %393 = vrot.lane.b32.xlu0 %v347, 17
    %v394 = vpop.permute.xlu0 %393
    %395 = vrot.lane.b32.xlu0 %v348, 17
    %v396 = vpop.permute.xlu0 %395
    %397 = vrot.lane.b32.xlu0 %v349, 17
    %v398 = vpop.permute.xlu0 %397
    %399 = vrot.lane.b32.xlu0 %v350, 17
    %v400 = vpop.permute.xlu0 %399
    %401 = vrot.lane.b32.xlu0 %v351, 17
    %v402 = vpop.permute.xlu0 %401
    %403 = vrot.lane.b32.xlu0 %v352, 17
    %v404 = vpop.permute.xlu0 %403
    %vm405 = vcmp.lt.s32.totalorder %v366, 17
    %v406 = vsel %vm405, %v402, %v404
    %v407 = vsel %vm405, %v400, %v402
    %v408 = vsel %vm405, %v398, %v400
    %v409 = vsel %vm405, %v396, %v398
    %v410 = vsel %vm405, %v394, %v396
    %v411 = vsel %vm405, %v404, %v394
    %412 = vrot.lane.b32.xlu0 %v347, 1
    %v413 = vpop.permute.xlu0 %412
    %414 = vrot.lane.b32.xlu0 %v348, 1
    %v415 = vpop.permute.xlu0 %414
    %416 = vrot.lane.b32.xlu0 %v349, 1
    %v417 = vpop.permute.xlu0 %416
    %418 = vrot.lane.b32.xlu0 %v350, 1
    %v419 = vpop.permute.xlu0 %418
    %420 = vrot.lane.b32.xlu0 %v351, 1
    %v421 = vpop.permute.xlu0 %420
    %422 = vrot.lane.b32.xlu0 %v352, 1
    %v423 = vpop.permute.xlu0 %422
    %vm424 = vcmp.lt.s32.totalorder %v366, 1
    %v425 = vsel %vm424, %v421, %v423
    %v426 = vsel %vm424, %v419, %v421
    %v427 = vsel %vm424, %v417, %v419
    %v428 = vsel %vm424, %v415, %v417
    %v429 = vsel %vm424, %v413, %v415
    %v430 = vsel %vm424, %v423, %v413
    %431 = vrot.lane.b32.xlu0 %v347, 127
    %v432 = vpop.permute.xlu0 %431
    %433 = vrot.lane.b32.xlu0 %v348, 127
    %v434 = vpop.permute.xlu0 %433
    %435 = vrot.lane.b32.xlu0 %v349, 127
    %v436 = vpop.permute.xlu0 %435
    %437 = vrot.lane.b32.xlu0 %v350, 127
    %v438 = vpop.permute.xlu0 %437
    %439 = vrot.lane.b32.xlu0 %v351, 127
    %v440 = vpop.permute.xlu0 %439
    %441 = vrot.lane.b32.xlu0 %v352, 127
    %v442 = vpop.permute.xlu0 %441
    %vm443 = vcmp.lt.s32.totalorder %v366, 127
    %v444 = vsel %vm443, %v440, %v442
    %v445 = vsel %vm443, %v438, %v440
    %v446 = vsel %vm443, %v436, %v438
    %v447 = vsel %vm443, %v434, %v436
    %v448 = vsel %vm443, %v432, %v434
    %v449 = vsel %vm443, %v442, %v432
    %450 = vrot.lane.b32.xlu0 %v347, 111
    %v451 = vpop.permute.xlu0 %450
    %452 = vrot.lane.b32.xlu0 %v348, 111
    %v453 = vpop.permute.xlu0 %452
    %454 = vrot.lane.b32.xlu0 %v349, 111
    %v455 = vpop.permute.xlu0 %454
    %456 = vrot.lane.b32.xlu0 %v350, 111
    %v457 = vpop.permute.xlu0 %456
    %458 = vrot.lane.b32.xlu0 %v351, 111
    %v459 = vpop.permute.xlu0 %458
    %460 = vrot.lane.b32.xlu0 %v352, 111
    %v461 = vpop.permute.xlu0 %460
    %vm462 = vcmp.lt.s32.totalorder %v366, 111
    %v463 = vsel %vm462, %v459, %v461
    %v464 = vsel %vm462, %v457, %v459
    %v465 = vsel %vm462, %v455, %v457
    %v466 = vsel %vm462, %v453, %v455
    %v467 = vsel %vm462, %v451, %v453
    %v468 = vsel %vm462, %v461, %v451
    %469 = vrot.lane.b32.xlu0 %v347, 110
    %v470 = vpop.permute.xlu0 %469
    %471 = vrot.lane.b32.xlu0 %v348, 110
    %v472 = vpop.permute.xlu0 %471
    %473 = vrot.lane.b32.xlu0 %v349, 110
    %v474 = vpop.permute.xlu0 %473
    %475 = vrot.lane.b32.xlu0 %v350, 110
    %v476 = vpop.permute.xlu0 %475
    %477 = vrot.lane.b32.xlu0 %v351, 110
    %v478 = vpop.permute.xlu0 %477
    %479 = vrot.lane.b32.xlu0 %v352, 110
    %v480 = vpop.permute.xlu0 %479
    %vm481 = vcmp.lt.s32.totalorder %v366, 110
    %v482 = vsel %vm481, %v478, %v480
    %v483 = vsel %vm481, %v476, %v478
    %v484 = vsel %vm481, %v474, %v476
    %v485 = vsel %vm481, %v472, %v474
    %v486 = vsel %vm481, %v470, %v472
    %v487 = vsel %vm481, %v480, %v470
    %488 = vrot.lane.b32.xlu0 %v347, 109
    %v489 = vpop.permute.xlu0 %488
    %490 = vrot.lane.b32.xlu0 %v348, 109
    %v491 = vpop.permute.xlu0 %490
    %492 = vrot.lane.b32.xlu0 %v349, 109
    %v493 = vpop.permute.xlu0 %492
    %494 = vrot.lane.b32.xlu0 %v350, 109
    %v495 = vpop.permute.xlu0 %494
    %496 = vrot.lane.b32.xlu0 %v351, 109
    %v497 = vpop.permute.xlu0 %496
    %498 = vrot.lane.b32.xlu0 %v352, 109
    %v499 = vpop.permute.xlu0 %498
    %vm500 = vcmp.lt.s32.totalorder %v366, 109
    %v501 = vsel %vm500, %v497, %v499
    %v502 = vsel %vm500, %v495, %v497
    %v503 = vsel %vm500, %v493, %v495
    %v504 = vsel %vm500, %v491, %v493
    %v505 = vsel %vm500, %v489, %v491
    %v506 = vsel %vm500, %v499, %v489
    %v507 = vpack.c.bf16 %v392, %v373
    %v508 = vpack.c.bf16 %v391, %v372
    %v509 = vpack.c.bf16 %v390, %v371
    %v510 = vpack.c.bf16 %v389, %v370
    %v511 = vpack.c.bf16 %v388, %v369
    %v512 = vpack.c.bf16 %v387, %v368
    %v513 = vpack.c.bf16 %v430, %v411
    %v514 = vpack.c.bf16 %v429, %v410
    %v515 = vpack.c.bf16 %v428, %v409
    %v516 = vpack.c.bf16 %v427, %v408
    %v517 = vpack.c.bf16 %v426, %v407
    %v518 = vpack.c.bf16 %v425, %v406
    %v519 = vpack.c.bf16 %v448, %v347
    %v520 = vpack.c.bf16 %v447, %v348
    %v521 = vpack.c.bf16 %v446, %v349
    %v522 = vpack.c.bf16 %v445, %v350
    %v523 = vpack.c.bf16 %v444, %v351
    %v524 = vpack.c.bf16 %v449, %v352
    %v525 = vpack.c.bf16 %v486, %v467
    %v526 = vpack.c.bf16 %v485, %v466
    %v527 = vpack.c.bf16 %v484, %v465
    %v528 = vpack.c.bf16 %v483, %v464
    %v529 = vpack.c.bf16 %v482, %v463
    %v530 = vpack.c.bf16 %v487, %v468
    %v531 = vpack.c.bf16 %v505, %v505
    %v532 = vpack.c.bf16 %v504, %v504
    %v533 = vpack.c.bf16 %v503, %v503
    %v534 = vpack.c.bf16 %v502, %v502
    %v535 = vpack.c.bf16 %v501, %v501
    %v536 = vpack.c.bf16 %v506, %v506
    %v537 = vld [vmem:[%s6] sm:$0xff]
    %v538 = vpack.c.bf16 %v537, %v537
    %v539 = vld [vmem:[%s7] sm:$0xff]
    %541 = vset.pattern.permute.xlu0 0
    %542 = vperm.xlu0 %541, %v539
    %v543 = vpop.permute.xlu0 %542
    %vm545 = vcmask 588800
    %v547 = vsel %vm545, %v538, 0
    %vm549 = vcmask 1043456
    %v551 = vsel %vm549, %v531, 0
    %v554 = vsel %vm549, %v532, 0
    %v557 = vsel %vm549, %v533, 0
    %v560 = vsel %vm549, %v534, 0
    %v563 = vsel %vm549, %v535, 0
    %v566 = vsel %vm549, %v536, 0
    %568 = vmatprep.subr.bf16.mxu0 %v508
    %569 = vmatpush1.bf16.msra.mxu0 %v507
    %570 = vmatprep.subr.bf16.mxu0 %v514
    %571 = vmatpush1.bf16.msra.mxu0 %v513
    %572 = vmatprep.subr.bf16.mxu0 %v520
    %573 = vmatpush1.bf16.msra.mxu0 %v519
    %574 = vmatprep.subr.bf16.mxu0 %v526
    %575 = vmatpush1.bf16.msra.mxu0 %v525
    %576 = vmatprep.subr.bf16.mxu0 %v554
    %577 = vmatpush1.bf16.msra.mxu0 %v551
    %578 = vmatprep.subr.bf16.mxu0 0
    %579 = vmatpush1.bf16.msra.mxu0 0
    %580 = vmatprep.subr.bf16.mxu0 0
    %581 = vmatpush1.bf16.msra.mxu0 0
    %582 = vmatprep.subr.bf16.mxu0 0
    %583 = vmatpush1.bf16.msra.mxu0 0
    %584 = vmatprep.subr.bf16.mxu0 0
    %585 = vmatpush1.bf16.msra.mxu0 0
    %586 = vmatprep.subr.bf16.mxu0 0
    %587 = vmatpush1.bf16.msra.mxu0 0
    %588 = vmatprep.subr.bf16.mxu0 0
    %589 = vmatpush1.bf16.msra.mxu0 0
    %590 = vmatprep.subr.bf16.mxu0 0
    %591 = vmatpush1.bf16.msra.mxu0 0
    %592 = vmatprep.subr.bf16.mxu0 0
    %593 = vmatpush1.bf16.msra.mxu0 0
    %594 = vmatprep.subr.bf16.mxu0 0
    %595 = vmatpush1.bf16.msra.mxu0 0
    %596 = vmatprep.subr.bf16.mxu0 0
    %597 = vmatpush1.bf16.msra.mxu0 0
    %598 = vmatprep.subr.bf16.mxu0 0
    %599 = vmatpush1.bf16.msra.mxu0 0
    %600 = vmatprep.mubr.bf16.mxu0 0
    %601 = vmatmul.mubr.bf16.gmra.mrb[0].mxu0 %v547
    %v602 = vpop.f32.mrb[0].mxu0
    %v603 = vadd.f32 %v543, %v602
    %v604 = vpop.f32.mrb[0].mxu0
    %v605 = vadd.f32 %v543, %v604
    %v606 = vpop.f32.mrb[0].mxu0
    %v607 = vpop.f32.mrb[0].mxu0
    %608 = vdwg.mxu0
    %609 = vmatprep.subr.bf16.mxu0 %v510
    %610 = vmatpush1.bf16.msra.mxu0 %v509
    %611 = vmatprep.subr.bf16.mxu0 %v516
    %612 = vmatpush1.bf16.msra.mxu0 %v515
    %613 = vmatprep.subr.bf16.mxu0 %v522
    %614 = vmatpush1.bf16.msra.mxu0 %v521
    %615 = vmatprep.subr.bf16.mxu0 %v528
    %616 = vmatpush1.bf16.msra.mxu0 %v527
    %617 = vmatprep.subr.bf16.mxu0 %v560
    %618 = vmatpush1.bf16.msra.mxu0 %v557
    %619 = vmatprep.subr.bf16.mxu0 0
    %620 = vmatpush1.bf16.msra.mxu0 0
    %621 = vmatprep.subr.bf16.mxu0 0
    %622 = vmatpush1.bf16.msra.mxu0 0
    %623 = vmatprep.subr.bf16.mxu0 0
    %624 = vmatpush1.bf16.msra.mxu0 0
    %625 = vmatprep.subr.bf16.mxu0 0
    %626 = vmatpush1.bf16.msra.mxu0 0
    %627 = vmatprep.subr.bf16.mxu0 0
    %628 = vmatpush1.bf16.msra.mxu0 0
    %629 = vmatprep.subr.bf16.mxu0 0
    %630 = vmatpush1.bf16.msra.mxu0 0
    %631 = vmatprep.subr.bf16.mxu0 0
    %632 = vmatpush1.bf16.msra.mxu0 0
    %633 = vmatprep.subr.bf16.mxu0 0
    %634 = vmatpush1.bf16.msra.mxu0 0
    %635 = vmatprep.subr.bf16.mxu0 0
    %636 = vmatpush1.bf16.msra.mxu0 0
    %637 = vmatprep.subr.bf16.mxu0 0
    %638 = vmatpush1.bf16.msra.mxu0 0
    %639 = vmatprep.subr.bf16.mxu0 0
    %640 = vmatpush1.bf16.msra.mxu0 0
    %641 = vmatprep.mubr.bf16.mxu0 0
    %642 = vmatmul.mubr.bf16.gmra.mrb[0].mxu0 %v547
    %v643 = vpop.f32.mrb[0].mxu0
    %v644 = vadd.f32 %v543, %v643
    %v645 = vpop.f32.mrb[0].mxu0
    %v646 = vadd.f32 %v543, %v645
    %v647 = vpop.f32.mrb[0].mxu0
    %v648 = vpop.f32.mrb[0].mxu0
    %649 = vdwg.mxu0
    %650 = vmatprep.subr.bf16.mxu0 %v512
    %651 = vmatpush1.bf16.msra.mxu0 %v511
    %652 = vmatprep.subr.bf16.mxu0 %v518
    %653 = vmatpush1.bf16.msra.mxu0 %v517
    %654 = vmatprep.subr.bf16.mxu0 %v524
    %655 = vmatpush1.bf16.msra.mxu0 %v523
    %656 = vmatprep.subr.bf16.mxu0 %v530
    %657 = vmatpush1.bf16.msra.mxu0 %v529
    %658 = vmatprep.subr.bf16.mxu0 %v566
    %659 = vmatpush1.bf16.msra.mxu0 %v563
    %660 = vmatprep.subr.bf16.mxu0 0
    %661 = vmatpush1.bf16.msra.mxu0 0
    %662 = vmatprep.subr.bf16.mxu0 0
    %663 = vmatpush1.bf16.msra.mxu0 0
    %664 = vmatprep.subr.bf16.mxu0 0
    %665 = vmatpush1.bf16.msra.mxu0 0
    %666 = vmatprep.subr.bf16.mxu0 0
    %667 = vmatpush1.bf16.msra.mxu0 0
    %668 = vmatprep.subr.bf16.mxu0 0
    %669 = vmatpush1.bf16.msra.mxu0 0
    %670 = vmatprep.subr.bf16.mxu0 0
    %671 = vmatpush1.bf16.msra.mxu0 0
    %672 = vmatprep.subr.bf16.mxu0 0
    %673 = vmatpush1.bf16.msra.mxu0 0
    %674 = vmatprep.subr.bf16.mxu0 0
    %675 = vmatpush1.bf16.msra.mxu0 0
    %676 = vmatprep.subr.bf16.mxu0 0
    %677 = vmatpush1.bf16.msra.mxu0 0
    %678 = vmatprep.subr.bf16.mxu0 0
    %679 = vmatpush1.bf16.msra.mxu0 0
    %680 = vmatprep.subr.bf16.mxu0 0
    %681 = vmatpush1.bf16.msra.mxu0 0
    %682 = vmatprep.mubr.bf16.mxu0 0
    %683 = vmatmul.mubr.bf16.gmra.mrb[0].mxu0 %v547
    %v684 = vpop.f32.mrb[0].mxu0
    %v685 = vadd.f32 %v543, %v684
    %v686 = vpop.f32.mrb[0].mxu0
    %v687 = vadd.f32 %v543, %v686
    %v688 = vpop.f32.mrb[0].mxu0
    %v689 = vpop.f32.mrb[0].mxu0
    %690 = vdwg.mxu0
    %v691 = vld [vmem:[%s8] sm:$0xff]
    %v692 = vld [vmem:[%s9] sm:$0xff]
    %v693 = vmul.f32 %v603, %v248
    %v694 = vmul.f32 %v605, %v252
    %v695 = vmul.f32 %v644, %v256
    %v696 = vmul.f32 %v646, %v260
    %v697 = vmul.f32 %v685, %v264
    %v698 = vmul.f32 %v687, %v268
    %v699 = vadd.f32 %v693, %v694
    %v700 = vadd.f32 %v699, %v695
    %v701 = vadd.f32 %v700, %v696
    %v702 = vadd.f32 %v701, %v697
    %v703 = vadd.f32 %v702, %v698
    %704 = vadd.xlane.f32.xlu0 %v703
    %v705 = vpop.xlane.xlu0 %704
    %v706 = vmul.f32 %v693, %v603
    %v707 = vmul.f32 %v694, %v605
    %v708 = vmul.f32 %v695, %v644
    %v709 = vmul.f32 %v696, %v646
    %v710 = vmul.f32 %v697, %v685
    %v711 = vmul.f32 %v698, %v687
    %v712 = vadd.f32 %v706, %v707
    %v713 = vadd.f32 %v712, %v708
    %v714 = vadd.f32 %v713, %v709
    %v715 = vadd.f32 %v714, %v710
    %v716 = vadd.f32 %v715, %v711
    %717 = vadd.xlane.f32.xlu0 %v716
    %v718 = vpop.xlane.xlu0 %717
    %v719 = vmul.f32 %v705, 0.001953125
    %v720 = vmul.f32 %v718, 0.001953125
    %v721 = vmul.f32 %v719, %v719
    %v722 = vsub.f32 %v720, %v721
    %v723 = vsub.f32 %v603, %v719
    %v724 = vsub.f32 %v605, %v719
    %v725 = vsub.f32 %v644, %v719
    %v726 = vsub.f32 %v646, %v719
    %v727 = vsub.f32 %v685, %v719
    %v728 = vsub.f32 %v687, %v719
    %v729 = vadd.f32 %v722, 1e-05
    %v730 = vrsqrt.pop %v729
    %v731 = vmul.f32 %v723, %v730
    %v732 = vmul.f32 %v724, %v730
    %v733 = vmul.f32 %v725, %v730
    %v734 = vmul.f32 %v726, %v730
    %v735 = vmul.f32 %v727, %v730
    %v736 = vmul.f32 %v728, %v730
    %738 = vset.pattern.permute.xlu0 0
    %739 = vperm.xlu0 %738, %v691
    %v740 = vpop.permute.xlu0 %739
    %v742 = vmul.f32 %v731, %v740
    %v743 = vmul.f32 %v732, %v740
    %v744 = vmul.f32 %v733, %v740
    %v745 = vmul.f32 %v734, %v740
    %v746 = vmul.f32 %v735, %v740
    %v747 = vmul.f32 %v736, %v740
    %749 = vset.pattern.permute.xlu0 0
    %750 = vperm.xlu0 %749, %v692
    %v751 = vpop.permute.xlu0 %750
    %v753 = vadd.f32 %v742, %v751
    %v754 = vadd.f32 %v743, %v751
    %v755 = vadd.f32 %v744, %v751
    %v756 = vadd.f32 %v745, %v751
    %v757 = vadd.f32 %v746, %v751
    %v758 = vadd.f32 %v747, %v751
    %v759 = vmax.f32 %v753, 0.0
    %v760 = vmax.f32 %v754, 0.0
    %v761 = vmax.f32 %v755, 0.0
    %v762 = vmax.f32 %v756, 0.0
    %v763 = vmax.f32 %v757, 0.0
    %v764 = vmax.f32 %v758, 0.0
    %v765 = vld [vmem:[%s14] sm:$0xff]
    %v766 = vld [vmem:[%s14 + $0x8] sm:$0xff]
    %v767 = vpack.c.bf16 %v766, %v765
    %v769 = vsel %vm96, %v767, 0
    %771 = vmatprep.subr.bf16.mxu0 %v105
    %772 = vmatpush1.bf16.msra.mxu0 %v102
    %773 = vmatprep.subr.bf16.mxu0 0
    %774 = vmatpush1.bf16.msra.mxu0 0
    %775 = vmatprep.subr.bf16.mxu0 0
    %776 = vmatpush1.bf16.msra.mxu0 0
    %777 = vmatprep.subr.bf16.mxu0 0
    %778 = vmatpush1.bf16.msra.mxu0 0
    %779 = vmatprep.subr.bf16.mxu0 0
    %780 = vmatpush1.bf16.msra.mxu0 0
    %781 = vmatprep.subr.bf16.mxu0 0
    %782 = vmatpush1.bf16.msra.mxu0 0
    %783 = vmatprep.subr.bf16.mxu0 0
    %784 = vmatpush1.bf16.msra.mxu0 0
    %785 = vmatprep.subr.bf16.mxu0 0
    %786 = vmatpush1.bf16.msra.mxu0 0
    %787 = vmatprep.subr.bf16.mxu0 0
    %788 = vmatpush1.bf16.msra.mxu0 0
    %789 = vmatprep.subr.bf16.mxu0 0
    %790 = vmatpush1.bf16.msra.mxu0 0
    %791 = vmatprep.subr.bf16.mxu0 0
    %792 = vmatpush1.bf16.msra.mxu0 0
    %793 = vmatprep.subr.bf16.mxu0 0
    %794 = vmatpush1.bf16.msra.mxu0 0
    %795 = vmatprep.subr.bf16.mxu0 0
    %796 = vmatpush1.bf16.msra.mxu0 0
    %797 = vmatprep.subr.bf16.mxu0 0
    %798 = vmatpush1.bf16.msra.mxu0 0
    %799 = vmatprep.subr.bf16.mxu0 0
    %800 = vmatpush1.bf16.msra.mxu0 0
    %801 = vmatprep.subr.bf16.mxu0 0
    %802 = vmatpush1.bf16.msra.mxu0 0
    %803 = vmatprep.mubr.bf16.mxu0 0
    %804 = vmatmul.mubr.bf16.gmra.mrb[0].mxu0 %v769
    %v805 = vpop.f32.mrb[0].mxu0
    %v806 = vadd.f32 0.0, %v805
    %v807 = vpop.f32.mrb[0].mxu0
    %v808 = vadd.f32 0.0, %v807
    %v809 = vpop.f32.mrb[0].mxu0
    %v810 = vadd.f32 0.0, %v809
    %v811 = vpop.f32.mrb[0].mxu0
    %v812 = vadd.f32 0.0, %v811
    %813 = vdwg.mxu0
    %814 = vmatprep.subr.bf16.mxu0 %v111
    %815 = vmatpush1.bf16.msra.mxu0 %v108
    %816 = vmatprep.subr.bf16.mxu0 0
    %817 = vmatpush1.bf16.msra.mxu0 0
    %818 = vmatprep.subr.bf16.mxu0 0
    %819 = vmatpush1.bf16.msra.mxu0 0
    %820 = vmatprep.subr.bf16.mxu0 0
    %821 = vmatpush1.bf16.msra.mxu0 0
    %822 = vmatprep.subr.bf16.mxu0 0
    %823 = vmatpush1.bf16.msra.mxu0 0
    %824 = vmatprep.subr.bf16.mxu0 0
    %825 = vmatpush1.bf16.msra.mxu0 0
    %826 = vmatprep.subr.bf16.mxu0 0
    %827 = vmatpush1.bf16.msra.mxu0 0
    %828 = vmatprep.subr.bf16.mxu0 0
    %829 = vmatpush1.bf16.msra.mxu0 0
    %830 = vmatprep.subr.bf16.mxu0 0
    %831 = vmatpush1.bf16.msra.mxu0 0
    %832 = vmatprep.subr.bf16.mxu0 0
    %833 = vmatpush1.bf16.msra.mxu0 0
    %834 = vmatprep.subr.bf16.mxu0 0
    %835 = vmatpush1.bf16.msra.mxu0 0
    %836 = vmatprep.subr.bf16.mxu0 0
    %837 = vmatpush1.bf16.msra.mxu0 0
    %838 = vmatprep.subr.bf16.mxu0 0
    %839 = vmatpush1.bf16.msra.mxu0 0
    %840 = vmatprep.subr.bf16.mxu0 0
    %841 = vmatpush1.bf16.msra.mxu0 0
    %842 = vmatprep.subr.bf16.mxu0 0
    %843 = vmatpush1.bf16.msra.mxu0 0
    %844 = vmatprep.subr.bf16.mxu0 0
    %845 = vmatpush1.bf16.msra.mxu0 0
    %846 = vmatprep.mubr.bf16.mxu0 0
    %847 = vmatmul.mubr.bf16.gmra.mrb[0].mxu0 %v769
    %v848 = vpop.f32.mrb[0].mxu0
    %v849 = vadd.f32 0.0, %v848
    %v850 = vpop.f32.mrb[0].mxu0
    %v851 = vadd.f32 0.0, %v850
    %v852 = vpop.f32.mrb[0].mxu0
    %v853 = vadd.f32 0.0, %v852
    %v854 = vpop.f32.mrb[0].mxu0
    %v855 = vadd.f32 0.0, %v854
    %856 = vdwg.mxu0
    %857 = vmatprep.subr.bf16.mxu0 %v117
    %858 = vmatpush1.bf16.msra.mxu0 %v114
    %859 = vmatprep.subr.bf16.mxu0 0
    %860 = vmatpush1.bf16.msra.mxu0 0
    %861 = vmatprep.subr.bf16.mxu0 0
    %862 = vmatpush1.bf16.msra.mxu0 0
    %863 = vmatprep.subr.bf16.mxu0 0
    %864 = vmatpush1.bf16.msra.mxu0 0
    %865 = vmatprep.subr.bf16.mxu0 0
    %866 = vmatpush1.bf16.msra.mxu0 0
    %867 = vmatprep.subr.bf16.mxu0 0
    %868 = vmatpush1.bf16.msra.mxu0 0
    %869 = vmatprep.subr.bf16.mxu0 0
    %870 = vmatpush1.bf16.msra.mxu0 0
    %871 = vmatprep.subr.bf16.mxu0 0
    %872 = vmatpush1.bf16.msra.mxu0 0
    %873 = vmatprep.subr.bf16.mxu0 0
    %874 = vmatpush1.bf16.msra.mxu0 0
    %875 = vmatprep.subr.bf16.mxu0 0
    %876 = vmatpush1.bf16.msra.mxu0 0
    %877 = vmatprep.subr.bf16.mxu0 0
    %878 = vmatpush1.bf16.msra.mxu0 0
    %879 = vmatprep.subr.bf16.mxu0 0
    %880 = vmatpush1.bf16.msra.mxu0 0
    %881 = vmatprep.subr.bf16.mxu0 0
    %882 = vmatpush1.bf16.msra.mxu0 0
    %883 = vmatprep.subr.bf16.mxu0 0
    %884 = vmatpush1.bf16.msra.mxu0 0
    %885 = vmatprep.subr.bf16.mxu0 0
    %886 = vmatpush1.bf16.msra.mxu0 0
    %887 = vmatprep.subr.bf16.mxu0 0
    %888 = vmatpush1.bf16.msra.mxu0 0
    %889 = vmatprep.mubr.bf16.mxu0 0
    %890 = vmatmul.mubr.bf16.gmra.mrb[0].mxu0 %v769
    %v891 = vpop.f32.mrb[0].mxu0
    %v892 = vadd.f32 0.0, %v891
    %v893 = vpop.f32.mrb[0].mxu0
    %v894 = vadd.f32 0.0, %v893
    %v895 = vpop.f32.mrb[0].mxu0
    %v896 = vadd.f32 0.0, %v895
    %v897 = vpop.f32.mrb[0].mxu0
    %v898 = vadd.f32 0.0, %v897
    %899 = vdwg.mxu0
    %v900 = vld [vmem:[%s15] sm:$0xff]
    %v901 = vld [vmem:[%s15 + $0x8] sm:$0xff]
    %v902 = vld [vmem:[%s16] sm:$0xff]
    %v903 = vld [vmem:[%s16 + $0x8] sm:$0xff]
    %v904 = vmul.f32 %v806, %v248
    %v905 = vmul.f32 %v808, %v252
    %v906 = vmul.f32 %v849, %v256
    %v907 = vmul.f32 %v851, %v260
    %v908 = vmul.f32 %v892, %v264
    %v909 = vmul.f32 %v894, %v268
    %v910 = vmul.f32 %v810, %v248
    %v911 = vmul.f32 %v812, %v252
    %v912 = vmul.f32 %v853, %v256
    %v913 = vmul.f32 %v855, %v260
    %v914 = vmul.f32 %v896, %v264
    %v915 = vmul.f32 %v898, %v268
    %v916 = vadd.f32 %v904, %v905
    %v917 = vadd.f32 %v916, %v906
    %v918 = vadd.f32 %v917, %v907
    %v919 = vadd.f32 %v918, %v908
    %v920 = vadd.f32 %v919, %v909
    %921 = vadd.xlane.f32.xlu0 %v920
    %v922 = vpop.xlane.xlu0 %921
    %v923 = vadd.f32 %v910, %v911
    %v924 = vadd.f32 %v923, %v912
    %v925 = vadd.f32 %v924, %v913
    %v926 = vadd.f32 %v925, %v914
    %v927 = vadd.f32 %v926, %v915
    %928 = vadd.xlane.f32.xlu0 %v927
    %v929 = vpop.xlane.xlu0 %928
    %v930 = vmul.f32 %v904, %v806
    %v931 = vmul.f32 %v905, %v808
    %v932 = vmul.f32 %v906, %v849
    %v933 = vmul.f32 %v907, %v851
    %v934 = vmul.f32 %v908, %v892
    %v935 = vmul.f32 %v909, %v894
    %v936 = vmul.f32 %v910, %v810
    %v937 = vmul.f32 %v911, %v812
    %v938 = vmul.f32 %v912, %v853
    %v939 = vmul.f32 %v913, %v855
    %v940 = vmul.f32 %v914, %v896
    %v941 = vmul.f32 %v915, %v898
    %v942 = vadd.f32 %v930, %v931
    %v943 = vadd.f32 %v942, %v932
    %v944 = vadd.f32 %v943, %v933
    %v945 = vadd.f32 %v944, %v934
    %v946 = vadd.f32 %v945, %v935
    %947 = vadd.xlane.f32.xlu0 %v946
    %v948 = vpop.xlane.xlu0 %947
    %v949 = vadd.f32 %v936, %v937
    %v950 = vadd.f32 %v949, %v938
    %v951 = vadd.f32 %v950, %v939
    %v952 = vadd.f32 %v951, %v940
    %v953 = vadd.f32 %v952, %v941
    %954 = vadd.xlane.f32.xlu0 %v953
    %v955 = vpop.xlane.xlu0 %954
    %v956 = vmul.f32 %v922, 0.001953125
    %v957 = vmul.f32 %v929, 0.001953125
    %v958 = vmul.f32 %v948, 0.001953125
    %v959 = vmul.f32 %v955, 0.001953125
    %v960 = vmul.f32 %v956, %v956
    %v961 = vmul.f32 %v957, %v957
    %v962 = vsub.f32 %v958, %v960
    %v963 = vsub.f32 %v959, %v961
    %v964 = vsub.f32 %v806, %v956
    %v965 = vsub.f32 %v808, %v956
    %v966 = vsub.f32 %v849, %v956
    %v967 = vsub.f32 %v851, %v956
    %v968 = vsub.f32 %v892, %v956
    %v969 = vsub.f32 %v894, %v956
    %v970 = vsub.f32 %v810, %v957
    %v971 = vsub.f32 %v812, %v957
    %v972 = vsub.f32 %v853, %v957
    %v973 = vsub.f32 %v855, %v957
    %v974 = vsub.f32 %v896, %v957
    %v975 = vsub.f32 %v898, %v957
    %v976 = vadd.f32 %v962, 1e-05
    %v977 = vadd.f32 %v963, 1e-05
    %v978 = vrsqrt.pop %v976
    %v979 = vrsqrt.pop %v977
    %v980 = vmul.f32 %v964, %v978
    %v981 = vmul.f32 %v965, %v978
    %v982 = vmul.f32 %v966, %v978
    %v983 = vmul.f32 %v967, %v978
    %v984 = vmul.f32 %v968, %v978
    %v985 = vmul.f32 %v969, %v978
    %v986 = vmul.f32 %v970, %v979
    %v987 = vmul.f32 %v971, %v979
    %v988 = vmul.f32 %v972, %v979
    %v989 = vmul.f32 %v973, %v979
    %v990 = vmul.f32 %v974, %v979
    %v991 = vmul.f32 %v975, %v979
    %993 = vset.pattern.permute.xlu0 0
    %994 = vperm.xlu0 %993, %v900
    %v995 = vpop.permute.xlu0 %994
    %998 = vset.pattern.permute.xlu0 0
    %999 = vperm.xlu0 %998, %v901
    %v1000 = vpop.permute.xlu0 %999
    %v1002 = vmul.f32 %v980, %v995
    %v1003 = vmul.f32 %v981, %v995
    %v1004 = vmul.f32 %v982, %v995
    %v1005 = vmul.f32 %v983, %v995
    %v1006 = vmul.f32 %v984, %v995
    %v1007 = vmul.f32 %v985, %v995
    %v1008 = vmul.f32 %v986, %v1000
    %v1009 = vmul.f32 %v987, %v1000
    %v1010 = vmul.f32 %v988, %v1000
    %v1011 = vmul.f32 %v989, %v1000
    %v1012 = vmul.f32 %v990, %v1000
    %v1013 = vmul.f32 %v991, %v1000
    %1015 = vset.pattern.permute.xlu0 0
    %1016 = vperm.xlu0 %1015, %v902
    %v1017 = vpop.permute.xlu0 %1016
    %1020 = vset.pattern.permute.xlu0 0
    %1021 = vperm.xlu0 %1020, %v903
    %v1022 = vpop.permute.xlu0 %1021
    %v1024 = vadd.f32 %v1002, %v1017
    %v1025 = vadd.f32 %v1003, %v1017
    %v1026 = vadd.f32 %v1004, %v1017
    %v1027 = vadd.f32 %v1005, %v1017
    %v1028 = vadd.f32 %v1006, %v1017
    %v1029 = vadd.f32 %v1007, %v1017
    %v1030 = vadd.f32 %v1008, %v1022
    %v1031 = vadd.f32 %v1009, %v1022
    %v1032 = vadd.f32 %v1010, %v1022
    %v1033 = vadd.f32 %v1011, %v1022
    %v1034 = vadd.f32 %v1012, %v1022
    %v1035 = vadd.f32 %v1013, %v1022
    %v1036 = vld [vmem:[%s10] sm:$0xff]
    %v1037 = vld [vmem:[%s10 + $0x8] sm:$0xff]
    %v1038 = vpack.c.bf16 %v1037, %v1036
    %v1039 = vpack.c.bf16 %v759, %v759
    %v1040 = vpack.c.bf16 %v760, %v760
    %v1041 = vpack.c.bf16 %v761, %v761
    %v1042 = vpack.c.bf16 %v762, %v762
    %v1043 = vpack.c.bf16 %v763, %v763
    %v1044 = vpack.c.bf16 %v764, %v764
    %v1045 = vld [vmem:[%s11] sm:$0xff]
    %v1046 = vld [vmem:[%s11 + $0x8] sm:$0xff]
    %1048 = vset.pattern.permute.xlu0 0
    %1049 = vperm.xlu0 %1048, %v1045
    %v1050 = vpop.permute.xlu0 %1049
    %1053 = vset.pattern.permute.xlu0 0
    %1054 = vperm.xlu0 %1053, %v1046
    %v1055 = vpop.permute.xlu0 %1054
    %vm1057 = vcmask 64512
    %v1059 = vsel %vm1057, %v1038, 0
    %v1062 = vsel %vm549, %v1039, 0
    %v1065 = vsel %vm549, %v1040, 0
    %v1068 = vsel %vm549, %v1041, 0
    %v1071 = vsel %vm549, %v1042, 0
    %v1074 = vsel %vm549, %v1043, 0
    %v1077 = vsel %vm549, %v1044, 0
    %1079 = vmatprep.subr.bf16.mxu0 %v1065
    %1080 = vmatpush1.bf16.msra.mxu0 %v1062
    %1081 = vmatprep.subr.bf16.mxu0 0
    %1082 = vmatpush1.bf16.msra.mxu0 0
    %1083 = vmatprep.subr.bf16.mxu0 0
    %1084 = vmatpush1.bf16.msra.mxu0 0
    %1085 = vmatprep.subr.bf16.mxu0 0
    %1086 = vmatpush1.bf16.msra.mxu0 0
    %1087 = vmatprep.subr.bf16.mxu0 0
    %1088 = vmatpush1.bf16.msra.mxu0 0
    %1089 = vmatprep.subr.bf16.mxu0 0
    %1090 = vmatpush1.bf16.msra.mxu0 0
    %1091 = vmatprep.subr.bf16.mxu0 0
    %1092 = vmatpush1.bf16.msra.mxu0 0
    %1093 = vmatprep.subr.bf16.mxu0 0
    %1094 = vmatpush1.bf16.msra.mxu0 0
    %1095 = vmatprep.subr.bf16.mxu0 0
    %1096 = vmatpush1.bf16.msra.mxu0 0
    %1097 = vmatprep.subr.bf16.mxu0 0
    %1098 = vmatpush1.bf16.msra.mxu0 0
    %1099 = vmatprep.subr.bf16.mxu0 0
    %1100 = vmatpush1.bf16.msra.mxu0 0
    %1101 = vmatprep.subr.bf16.mxu0 0
    %1102 = vmatpush1.bf16.msra.mxu0 0
    %1103 = vmatprep.subr.bf16.mxu0 0
    %1104 = vmatpush1.bf16.msra.mxu0 0
    %1105 = vmatprep.subr.bf16.mxu0 0
    %1106 = vmatpush1.bf16.msra.mxu0 0
    %1107 = vmatprep.subr.bf16.mxu0 0
    %1108 = vmatpush1.bf16.msra.mxu0 0
    %1109 = vmatprep.subr.bf16.mxu0 0
    %1110 = vmatpush1.bf16.msra.mxu0 0
    %1111 = vmatprep.mubr.bf16.mxu0 0
    %1112 = vmatmul.mubr.bf16.gmra.mrb[0].mxu0 %v1059
    %v1113 = vpop.f32.mrb[0].mxu0
    %v1114 = vadd.f32 %v1050, %v1113
    %v1115 = vpop.f32.mrb[0].mxu0
    %v1116 = vadd.f32 %v1050, %v1115
    %v1117 = vpop.f32.mrb[0].mxu0
    %v1118 = vadd.f32 %v1055, %v1117
    %v1119 = vpop.f32.mrb[0].mxu0
    %v1120 = vadd.f32 %v1055, %v1119
    %1121 = vdwg.mxu0
    %1122 = vmatprep.subr.bf16.mxu0 %v1071
    %1123 = vmatpush1.bf16.msra.mxu0 %v1068
    %1124 = vmatprep.subr.bf16.mxu0 0
    %1125 = vmatpush1.bf16.msra.mxu0 0
    %1126 = vmatprep.subr.bf16.mxu0 0
    %1127 = vmatpush1.bf16.msra.mxu0 0
    %1128 = vmatprep.subr.bf16.mxu0 0
    %1129 = vmatpush1.bf16.msra.mxu0 0
    %1130 = vmatprep.subr.bf16.mxu0 0
    %1131 = vmatpush1.bf16.msra.mxu0 0
    %1132 = vmatprep.subr.bf16.mxu0 0
    %1133 = vmatpush1.bf16.msra.mxu0 0
    %1134 = vmatprep.subr.bf16.mxu0 0
    %1135 = vmatpush1.bf16.msra.mxu0 0
    %1136 = vmatprep.subr.bf16.mxu0 0
    %1137 = vmatpush1.bf16.msra.mxu0 0
    %1138 = vmatprep.subr.bf16.mxu0 0
    %1139 = vmatpush1.bf16.msra.mxu0 0
    %1140 = vmatprep.subr.bf16.mxu0 0
    %1141 = vmatpush1.bf16.msra.mxu0 0
    %1142 = vmatprep.subr.bf16.mxu0 0
    %1143 = vmatpush1.bf16.msra.mxu0 0
    %1144 = vmatprep.subr.bf16.mxu0 0
    %1145 = vmatpush1.bf16.msra.mxu0 0
    %1146 = vmatprep.subr.bf16.mxu0 0
    %1147 = vmatpush1.bf16.msra.mxu0 0
    %1148 = vmatprep.subr.bf16.mxu0 0
    %1149 = vmatpush1.bf16.msra.mxu0 0
    %1150 = vmatprep.subr.bf16.mxu0 0
    %1151 = vmatpush1.bf16.msra.mxu0 0
    %1152 = vmatprep.subr.bf16.mxu0 0
    %1153 = vmatpush1.bf16.msra.mxu0 0
    %1154 = vmatprep.mubr.bf16.mxu0 0
    %1155 = vmatmul.mubr.bf16.gmra.mrb[0].mxu0 %v1059
    %v1156 = vpop.f32.mrb[0].mxu0
    %v1157 = vadd.f32 %v1050, %v1156
    %v1158 = vpop.f32.mrb[0].mxu0
    %v1159 = vadd.f32 %v1050, %v1158
    %v1160 = vpop.f32.mrb[0].mxu0
    %v1161 = vadd.f32 %v1055, %v1160
    %v1162 = vpop.f32.mrb[0].mxu0
    %v1163 = vadd.f32 %v1055, %v1162
    %1164 = vdwg.mxu0
    %1165 = vmatprep.subr.bf16.mxu0 %v1077
    %1166 = vmatpush1.bf16.msra.mxu0 %v1074
    %1167 = vmatprep.subr.bf16.mxu0 0
    %1168 = vmatpush1.bf16.msra.mxu0 0
    %1169 = vmatprep.subr.bf16.mxu0 0
    %1170 = vmatpush1.bf16.msra.mxu0 0
    %1171 = vmatprep.subr.bf16.mxu0 0
    %1172 = vmatpush1.bf16.msra.mxu0 0
    %1173 = vmatprep.subr.bf16.mxu0 0
    %1174 = vmatpush1.bf16.msra.mxu0 0
    %1175 = vmatprep.subr.bf16.mxu0 0
    %1176 = vmatpush1.bf16.msra.mxu0 0
    %1177 = vmatprep.subr.bf16.mxu0 0
    %1178 = vmatpush1.bf16.msra.mxu0 0
    %1179 = vmatprep.subr.bf16.mxu0 0
    %1180 = vmatpush1.bf16.msra.mxu0 0
    %1181 = vmatprep.subr.bf16.mxu0 0
    %1182 = vmatpush1.bf16.msra.mxu0 0
    %1183 = vmatprep.subr.bf16.mxu0 0
    %1184 = vmatpush1.bf16.msra.mxu0 0
    %1185 = vmatprep.subr.bf16.mxu0 0
    %1186 = vmatpush1.bf16.msra.mxu0 0
    %1187 = vmatprep.subr.bf16.mxu0 0
    %1188 = vmatpush1.bf16.msra.mxu0 0
    %1189 = vmatprep.subr.bf16.mxu0 0
    %1190 = vmatpush1.bf16.msra.mxu0 0
    %1191 = vmatprep.subr.bf16.mxu0 0
    %1192 = vmatpush1.bf16.msra.mxu0 0
    %1193 = vmatprep.subr.bf16.mxu0 0
    %1194 = vmatpush1.bf16.msra.mxu0 0
    %1195 = vmatprep.subr.bf16.mxu0 0
    %1196 = vmatpush1.bf16.msra.mxu0 0
    %1197 = vmatprep.mubr.bf16.mxu0 0
    %1198 = vmatmul.mubr.bf16.gmra.mrb[0].mxu0 %v1059
    %v1199 = vpop.f32.mrb[0].mxu0
    %v1200 = vadd.f32 %v1050, %v1199
    %v1201 = vpop.f32.mrb[0].mxu0
    %v1202 = vadd.f32 %v1050, %v1201
    %v1203 = vpop.f32.mrb[0].mxu0
    %v1204 = vadd.f32 %v1055, %v1203
    %v1205 = vpop.f32.mrb[0].mxu0
    %v1206 = vadd.f32 %v1055, %v1205
    %1207 = vdwg.mxu0
    %v1208 = vld [vmem:[%s12] sm:$0xff]
    %v1209 = vld [vmem:[%s12 + $0x8] sm:$0xff]
    %v1210 = vld [vmem:[%s13] sm:$0xff]
    %v1211 = vld [vmem:[%s13 + $0x8] sm:$0xff]
    %v1212 = vmul.f32 %v1114, %v248
    %v1213 = vmul.f32 %v1116, %v252
    %v1214 = vmul.f32 %v1157, %v256
    %v1215 = vmul.f32 %v1159, %v260
    %v1216 = vmul.f32 %v1200, %v264
    %v1217 = vmul.f32 %v1202, %v268
    %v1218 = vmul.f32 %v1118, %v248
    %v1219 = vmul.f32 %v1120, %v252
    %v1220 = vmul.f32 %v1161, %v256
    %v1221 = vmul.f32 %v1163, %v260
    %v1222 = vmul.f32 %v1204, %v264
    %v1223 = vmul.f32 %v1206, %v268
    %v1224 = vadd.f32 %v1212, %v1213
    %v1225 = vadd.f32 %v1224, %v1214
    %v1226 = vadd.f32 %v1225, %v1215
    %v1227 = vadd.f32 %v1226, %v1216
    %v1228 = vadd.f32 %v1227, %v1217
    %1229 = vadd.xlane.f32.xlu0 %v1228
    %v1230 = vpop.xlane.xlu0 %1229
    %v1231 = vadd.f32 %v1218, %v1219
    %v1232 = vadd.f32 %v1231, %v1220
    %v1233 = vadd.f32 %v1232, %v1221
    %v1234 = vadd.f32 %v1233, %v1222
    %v1235 = vadd.f32 %v1234, %v1223
    %1236 = vadd.xlane.f32.xlu0 %v1235
    %v1237 = vpop.xlane.xlu0 %1236
    %v1238 = vmul.f32 %v1212, %v1114
    %v1239 = vmul.f32 %v1213, %v1116
    %v1240 = vmul.f32 %v1214, %v1157
    %v1241 = vmul.f32 %v1215, %v1159
    %v1242 = vmul.f32 %v1216, %v1200
    %v1243 = vmul.f32 %v1217, %v1202
    %v1244 = vmul.f32 %v1218, %v1118
    %v1245 = vmul.f32 %v1219, %v1120
    %v1246 = vmul.f32 %v1220, %v1161
    %v1247 = vmul.f32 %v1221, %v1163
    %v1248 = vmul.f32 %v1222, %v1204
    %v1249 = vmul.f32 %v1223, %v1206
    %v1250 = vadd.f32 %v1238, %v1239
    %v1251 = vadd.f32 %v1250, %v1240
    %v1252 = vadd.f32 %v1251, %v1241
    %v1253 = vadd.f32 %v1252, %v1242
    %v1254 = vadd.f32 %v1253, %v1243
    %1255 = vadd.xlane.f32.xlu0 %v1254
    %v1256 = vpop.xlane.xlu0 %1255
    %v1257 = vadd.f32 %v1244, %v1245
    %v1258 = vadd.f32 %v1257, %v1246
    %v1259 = vadd.f32 %v1258, %v1247
    %v1260 = vadd.f32 %v1259, %v1248
    %v1261 = vadd.f32 %v1260, %v1249
    %1262 = vadd.xlane.f32.xlu0 %v1261
    %v1263 = vpop.xlane.xlu0 %1262
    %v1264 = vmul.f32 %v1230, 0.001953125
    %v1265 = vmul.f32 %v1237, 0.001953125
    %v1266 = vmul.f32 %v1256, 0.001953125
    %v1267 = vmul.f32 %v1263, 0.001953125
    %v1268 = vmul.f32 %v1264, %v1264
    %v1269 = vmul.f32 %v1265, %v1265
    %v1270 = vsub.f32 %v1266, %v1268
    %v1271 = vsub.f32 %v1267, %v1269
    %v1272 = vsub.f32 %v1114, %v1264
    %v1273 = vsub.f32 %v1116, %v1264
    %v1274 = vsub.f32 %v1157, %v1264
    %v1275 = vsub.f32 %v1159, %v1264
    %v1276 = vsub.f32 %v1200, %v1264
    %v1277 = vsub.f32 %v1202, %v1264
    %v1278 = vsub.f32 %v1118, %v1265
    %v1279 = vsub.f32 %v1120, %v1265
    %v1280 = vsub.f32 %v1161, %v1265
    %v1281 = vsub.f32 %v1163, %v1265
    %v1282 = vsub.f32 %v1204, %v1265
    %v1283 = vsub.f32 %v1206, %v1265
    %v1284 = vadd.f32 %v1270, 1e-05
    %v1285 = vadd.f32 %v1271, 1e-05
    %v1286 = vrsqrt.pop %v1284
    %v1287 = vrsqrt.pop %v1285
    %v1288 = vmul.f32 %v1272, %v1286
    %v1289 = vmul.f32 %v1273, %v1286
    %v1290 = vmul.f32 %v1274, %v1286
    %v1291 = vmul.f32 %v1275, %v1286
    %v1292 = vmul.f32 %v1276, %v1286
    %v1293 = vmul.f32 %v1277, %v1286
    %v1294 = vmul.f32 %v1278, %v1287
    %v1295 = vmul.f32 %v1279, %v1287
    %v1296 = vmul.f32 %v1280, %v1287
    %v1297 = vmul.f32 %v1281, %v1287
    %v1298 = vmul.f32 %v1282, %v1287
    %v1299 = vmul.f32 %v1283, %v1287
    %1301 = vset.pattern.permute.xlu0 0
    %1302 = vperm.xlu0 %1301, %v1208
    %v1303 = vpop.permute.xlu0 %1302
    %1306 = vset.pattern.permute.xlu0 0
    %1307 = vperm.xlu0 %1306, %v1209
    %v1308 = vpop.permute.xlu0 %1307
    %v1310 = vmul.f32 %v1288, %v1303
    %v1311 = vmul.f32 %v1289, %v1303
    %v1312 = vmul.f32 %v1290, %v1303
    %v1313 = vmul.f32 %v1291, %v1303
    %v1314 = vmul.f32 %v1292, %v1303
    %v1315 = vmul.f32 %v1293, %v1303
    %v1316 = vmul.f32 %v1294, %v1308
    %v1317 = vmul.f32 %v1295, %v1308
    %v1318 = vmul.f32 %v1296, %v1308
    %v1319 = vmul.f32 %v1297, %v1308
    %v1320 = vmul.f32 %v1298, %v1308
    %v1321 = vmul.f32 %v1299, %v1308
    %1323 = vset.pattern.permute.xlu0 0
    %1324 = vperm.xlu0 %1323, %v1210
    %v1325 = vpop.permute.xlu0 %1324
    %1328 = vset.pattern.permute.xlu0 0
    %1329 = vperm.xlu0 %1328, %v1211
    %v1330 = vpop.permute.xlu0 %1329
    %v1332 = vadd.f32 %v1310, %v1325
    %v1333 = vadd.f32 %v1311, %v1325
    %v1334 = vadd.f32 %v1312, %v1325
    %v1335 = vadd.f32 %v1313, %v1325
    %v1336 = vadd.f32 %v1314, %v1325
    %v1337 = vadd.f32 %v1315, %v1325
    %v1338 = vadd.f32 %v1316, %v1330
    %v1339 = vadd.f32 %v1317, %v1330
    %v1340 = vadd.f32 %v1318, %v1330
    %v1341 = vadd.f32 %v1319, %v1330
    %v1342 = vadd.f32 %v1320, %v1330
    %v1343 = vadd.f32 %v1321, %v1330
    %v1344 = vadd.f32 %v1332, %v1024
    %v1345 = vadd.f32 %v1333, %v1025
    %v1346 = vadd.f32 %v1334, %v1026
    %v1347 = vadd.f32 %v1335, %v1027
    %v1348 = vadd.f32 %v1336, %v1028
    %v1349 = vadd.f32 %v1337, %v1029
    %v1350 = vadd.f32 %v1338, %v1030
    %v1351 = vadd.f32 %v1339, %v1031
    %v1352 = vadd.f32 %v1340, %v1032
    %v1353 = vadd.f32 %v1341, %v1033
    %v1354 = vadd.f32 %v1342, %v1034
    %v1355 = vadd.f32 %v1343, %v1035
    %v1356 = vmax.f32 %v1344, 0.0
    %v1357 = vmax.f32 %v1345, 0.0
    %v1358 = vmax.f32 %v1346, 0.0
    %v1359 = vmax.f32 %v1347, 0.0
    %v1360 = vmax.f32 %v1348, 0.0
    %v1361 = vmax.f32 %v1349, 0.0
    %v1362 = vmax.f32 %v1350, 0.0
    %v1363 = vmax.f32 %v1351, 0.0
    %v1364 = vmax.f32 %v1352, 0.0
    %v1365 = vmax.f32 %v1353, 0.0
    %v1366 = vmax.f32 %v1354, 0.0
    %v1367 = vmax.f32 %v1355, 0.0
    %1368 = vst [vmem:[#allocation2] sm:$0xff] %v1356
    %1369 = vst [vmem:[#allocation2 + $0x8] sm:$0xff] %v1357
    %1370 = vst [vmem:[#allocation2 + $0x10] sm:$0xff] %v1358
    %1371 = vst [vmem:[#allocation2 + $0x18] sm:$0xff] %v1359
    %1372 = vst [vmem:[#allocation2 + $0x20] sm:$0xff] %v1360
    %1373 = vst [vmem:[#allocation2 + $0x28] sm:$0xff] %v1361
    %1374 = vst [vmem:[#allocation2 + $0x30] sm:$0xff] %v1362
    %1375 = vst [vmem:[#allocation2 + $0x38] sm:$0xff] %v1363
    %1376 = vst [vmem:[#allocation2 + $0x40] sm:$0xff] %v1364
    %1377 = vst [vmem:[#allocation2 + $0x48] sm:$0xff] %v1365
    %1378 = vst [vmem:[#allocation2 + $0x50] sm:$0xff] %v1366
    %1379 = vst [vmem:[#allocation2 + $0x58] sm:$0xff] %v1367
    // Predicated region
    $region70: #{tpu_custom_call.1} parent=1 // pred_check
      _
    $region71: #{tpu_custom_call.1} parent=1 // pred_check_branch
      %1381 = sbr.rel (0) target = $region73
    $region72: #{tpu_custom_call.1} parent=1 // pred_region
      %s1383 = ssub.s32 1536, 1536
      %1384 = vsyncadd [#allocation3], %s1383
      %s1385 = sshll.u32 [#allocation2], 4
      %s1386 = int_to_ptr.vmem [resolvable:$true] %s1385
      %1391 = dma.vmem_to_hbm [thread:$0]  %s1386, 1536, %s17, [#allocation3], 768, 768, 48
    $region73: #{tpu_custom_call.1} parent=1 // pred_fallthru
      _
    // Predicated region
    $region74: #{tpu_custom_call.1} parent=1 // pred_check
      _
    $region75: #{tpu_custom_call.1} parent=1 // pred_check_branch
      %1393 = sbr.rel (0) target = $region77
    $region76: #{tpu_custom_call.1} parent=1 // pred_region
      %1394 = dma.done [#allocation3], 1536
    $region77: #{tpu_custom_call.1} parent=1 // pred_fallthru
      _
    %1395 = vsyncpa [#allocation3], 1

</llo_original>
